<compile_context>
chip_gen: v5e
topology: v5e:2x2
jax: 0.10.0
libtpu: 0.0.40
codegen_flags: <defaults>
</compile_context>

<pallas_src>
import math
import functools

import jax
import jax.numpy as jnp
from jax.experimental import pallas as pl
from jax.experimental.pallas import tpu as pltpu


# ---------------------------------------------------------------------------
# Fused weight layout
#
#   w_rec  = (2H, 4H), column bands [f | i | k | o]:
#       rows 0:H   (h band):  [R1 | R2 | R3 | R4]
#       rows H:2H  (c band):  [L1 | L2 |  0 |  0]   # k has no c term,
#                                                   # o uses c_next (l4_t below)
#   w_in   = (D, 4H) = [W1 | W2 | W3 | W4]          # hoisted, time-parallel
#   l4_t   = (H, H)   peephole on c_next for the output gate.
# ---------------------------------------------------------------------------


def _lstm_seq_kernel(y_ref, h0_ref, c0_ref, wrec_ref, win_ref, l4_ref,
                     out_ref, hc_sc, pre_sc, *, hidden, tb):
    """Tb recurrent steps per grid iteration (carry [h|c] lives in VMEM scratch)."""
    H = hidden

    @pl.when(pl.program_id(0) == 0)
    def _init():
        hc_sc[:, 0:H] = h0_ref[...]
        hc_sc[:, H:2 * H] = c0_ref[...]

    # --- prologue: time-parallel input projection, one MXU pass with M=Tb ---
    pre_sc[...] = jnp.dot(y_ref[...], win_ref[...],
                          preferred_element_type=jnp.float32)            # (Tb, 4H)

    wrec = wrec_ref[...]          # (2H, 4H)  loop-invariant, VMEM resident
    l4 = l4_ref[...]              # (H, H)
    # TODO(synk): if a bundle dump shows per-step MXU weight pushes for `wrec`,
    # switch to explicit pltpu.matmul_push_rhs (push once before the loop)
    # + matmul_acc_lhs per step to keep the weights pushed across steps.

    # Static unroll: every slice offset below is a compile-time constant,
    # giving aligned, unmasked vector loads/stores (Tb is small).
    for t in range(tb):
        hc = hc_sc[...]                                                  # (1, 2H) = [h | c]
        c_prev = hc[:, H:2 * H]
        preact = pre_sc[t:t + 1, :] + jnp.dot(
            hc, wrec, preferred_element_type=jnp.float32)                # (1, 4H), one MXU pass

        # Nonlinearities only on the bands that need them.
        fi = jax.nn.sigmoid(preact[:, 0:2 * H])                          # [f | i]
        f = fi[:, 0:H]
        i = fi[:, H:2 * H]
        k = jnp.tanh(preact[:, 2 * H:3 * H])                             # k
        c_next = k * i + f * c_prev
        o = jax.nn.sigmoid(
            preact[:, 3 * H:4 * H]
            + jnp.dot(c_next, l4, preferred_element_type=jnp.float32))   # L4 peephole
        h_next = o * jnp.tanh(c_next)

        # carry for the next step (weights stay resident; only (1, 2H) updates)
        hc_sc[:, 0:H] = h_next
        hc_sc[:, H:2 * H] = c_next
        # row t of the (Tb, 2H) output slab (one HBM write-back per grid step)
        out_ref[t:t + 1, 0:H] = h_next
        out_ref[t:t + 1, H:2 * H] = c_next


# ---------------------------------------------------------------------------
# Wrappers
# ---------------------------------------------------------------------------
def lstm_flow_gate_sequence_pallas(y_seq, h0, c0, fused, *, input_length,
                                   hidden_length, block_t=None):
    """Run T recurrent steps; Tb timesteps per grid iteration (default: all)."""
    D, H = input_length, hidden_length
    T = y_seq.shape[0]
    Tb = T if block_t is None else block_t
    assert T % Tb == 0, "T must be a multiple of block_t"

    out = pl.pallas_call(
        functools.partial(_lstm_seq_kernel, hidden=H, tb=Tb),
        out_shape=jax.ShapeDtypeStruct((T, 2 * H), jnp.float32),
        grid_spec=pltpu.PrefetchScalarGridSpec(
            num_scalar_prefetch=0,
            grid=(T // Tb,),
            in_specs=[
                pl.BlockSpec((Tb, D), lambda b: (b, 0)),                 # y block
                pl.BlockSpec((1, H), lambda b: (0, 0)),                  # h0 (resident)
                pl.BlockSpec((1, H), lambda b: (0, 0)),                  # c0 (resident)
                pl.BlockSpec((2 * H, 4 * H), lambda b: (0, 0)),          # recurrent weights
                pl.BlockSpec((D, 4 * H), lambda b: (0, 0)),              # input weights
                pl.BlockSpec((H, H), lambda b: (0, 0)),                  # L4 peephole
            ],
            out_specs=pl.BlockSpec((Tb, 2 * H), lambda b: (b, 0)),
            scratch_shapes=[pltpu.VMEM((1, 2 * H), jnp.float32),         # [h | c] carry
                            pltpu.VMEM((Tb, 4 * H), jnp.float32)],       # hoisted pre_y
        ),
        compiler_params=pltpu.CompilerParams(
            dimension_semantics=("arbitrary",)),                         # recurrence is sequential
    )(y_seq.astype(jnp.float32), h0.astype(jnp.float32),
      c0.astype(jnp.float32), fused["w_rec"], fused["w_in"], fused["l4_t"])

    return out[:, :H], out[:, H:]


def lstm_cell_flow_gate_pallas(x, h, c_prev, fused, *, input_length, hidden_length):
    """Single forward step (== module.forward): the sequence kernel with T=1,
    avoiding an XLA-side concatenate and extra HBM staging buffer."""
    D = input_length
    # torch.take(x, arange(D)) -> flatten, take first D, reshape (1, D)
    y = jnp.ravel(x)[:D].reshape(1, D).astype(jnp.float32)
    h_next, c_next = lstm_flow_gate_sequence_pallas(
        y, h, c_prev, fused, input_length=D, hidden_length=hidden_length)
    return h_next, c_next


# ---------------------------------------------------------------------------
# Parameters (nn.Linear-style init, stored transposed to (in, out)) + fusion
# ---------------------------------------------------------------------------
def make_params(key, input_length, hidden_length):
    D, H = input_length, hidden_length
    names_shapes = [
        ("w1_t", (D, H)), ("r1_t", (H, H)), ("l1_t", (H, H)),
        ("w2_t", (D, H)), ("r2_t", (H, H)), ("l2_t", (H, H)),
        ("w3_t", (D, H)), ("r3_t", (H, H)),
        ("w4_t", (D, H)), ("r4_t", (H, H)), ("l4_t", (H, H)),
    ]
    params = {}
    keys = jax.random.split(key, len(names_shapes))
    for k, (name, shape) in zip(keys, names_shapes):
        bound = 1.0 / math.sqrt(shape[0])   # fan_in = in_features
        params[name] = jax.random.uniform(
            k, shape, dtype=jnp.float32, minval=-bound, maxval=bound)
    return params


def fuse_params(p, input_length, hidden_length):
    """Build the concatenated weight blocks (done ONCE, outside the hot path)."""
    H = hidden_length
    zeros = jnp.zeros((H, H), jnp.float32)
    h_band = jnp.concatenate([p["r1_t"], p["r2_t"], p["r3_t"], p["r4_t"]], axis=1)
    c_band = jnp.concatenate([p["l1_t"], p["l2_t"], zeros, zeros], axis=1)
    w_rec = jnp.concatenate([h_band, c_band], axis=0)                    # (2H, 4H)
    w_in = jnp.concatenate([p["w1_t"], p["w2_t"], p["w3_t"], p["w4_t"]], axis=1)  # (D, 4H)
    # NOTE: on v6e/v7x, casting w_rec/w_in/l4_t to bf16 here (keeping f32
    # accumulation) halves weight traffic, at ~1e-2 relative tolerance.
    return {"w_rec": w_rec, "w_in": w_in, "l4_t": p["l4_t"]}


# ---------------------------------------------------------------------------
# Pure-JAX references (mirror the PyTorch module exactly)
# ---------------------------------------------------------------------------
def reference_step(y, h, c_prev, p):
    sig = jax.nn.sigmoid
    f = sig(y @ p["w1_t"] + h @ p["r1_t"] + c_prev @ p["l1_t"])
    i = sig(y @ p["w2_t"] + h @ p["r2_t"] + c_prev @ p["l2_t"])
    k = jnp.tanh(y @ p["w3_t"] + h @ p["r3_t"])
    c_next = k * i + f * c_prev
    o = sig(y @ p["w4_t"] + h @ p["r4_t"] + c_next @ p["l4_t"])
    h_next = o * jnp.tanh(c_next)
    return h_next, c_next


if __name__ == "__main__":
    input_length = 8      # len(inputvar)=6 + stshy=2 (y = first 8 elements of x)
    hidden_length = 256   # module default; every band stays 128-lane aligned
    T = 16                # timesteps for the recurrent (sequence) kernel

    key = jax.random.PRNGKey(0)
    kp, kx, kh, kc, kxs = jax.random.split(key, 5)

    params = make_params(kp, input_length, hidden_length)
    fused = fuse_params(params, input_length, hidden_length)

    x = jax.random.normal(kx, (1, input_length), dtype=jnp.float32)
    h = jax.random.normal(kh, (1, hidden_length), dtype=jnp.float32)
    c_prev = jax.random.normal(kc, (1, hidden_length), dtype=jnp.float32)

    # --- single-step kernel (matches module.forward) ---
    step_fn = jax.jit(functools.partial(
        lstm_cell_flow_gate_pallas,
        input_length=input_length, hidden_length=hidden_length))
    h_next, c_next = step_fn(x, h, c_prev, fused)
    jax.block_until_ready((h_next, c_next))

    y = jnp.ravel(x)[:input_length].reshape(1, input_length)
    h_ref, c_ref = reference_step(y, h, c_prev, params)
    assert bool(jnp.allclose(h_next, h_ref, atol=1e-4, rtol=1e-4))
    assert bool(jnp.allclose(c_next, c_ref, atol=1e-4, rtol=1e-4))

    # --- recurrent kernel: whole time loop inside one grid step ---
    x_seq = jax.random.normal(kxs, (T, input_length), dtype=jnp.float32)
    seq_fn = jax.jit(functools.partial(
        lstm_flow_gate_sequence_pallas,
        input_length=input_length, hidden_length=hidden_length))
    h_seq, c_seq = seq_fn(x_seq, h, c_prev, fused)
    jax.block_until_ready((h_seq, c_seq))

    def scan_body(carry, y_t):
        hh, cc = carry
        hn, cn = reference_step(y_t[None, :], hh, cc, params)
        return (hn, cn), (hn[0], cn[0])

    (_, _), (h_seq_ref, c_seq_ref) = jax.lax.scan(scan_body, (h, c_prev), x_seq)
    assert bool(jnp.allclose(h_seq, h_seq_ref, atol=1e-4, rtol=1e-4))
    assert bool(jnp.allclose(c_seq, c_seq_ref, atol=1e-4, rtol=1e-4))

    print("KERNEL_OK")
</pallas_src>

<mosaic_0001>
module attributes {stable_mosaic.version = 11 : i64} {
  func.func @_lstm_seq_kernel(%arg0: i32, %arg1: memref<1x8xf32, #tpu.memory_space<vmem>>, %arg2: memref<1x256xf32, #tpu.memory_space<vmem>>, %arg3: memref<1x256xf32, #tpu.memory_space<vmem>>, %arg4: memref<512x1024xf32, #tpu.memory_space<vmem>>, %arg5: memref<8x1024xf32, #tpu.memory_space<vmem>>, %arg6: memref<256x256xf32, #tpu.memory_space<vmem>>, %arg7: memref<1x512xf32, #tpu.memory_space<vmem>>, %arg8: memref<1x512xf32, #tpu.memory_space<vmem>>, %arg9: memref<1x1024xf32, #tpu.memory_space<vmem>>) attributes {dimension_semantics = [#tpu.dimension_semantics<arbitrary>], iteration_bounds = array<i64: 1>, scalar_prefetch = 0 : i64, scratch_operands = 2 : i64, tpu.core_type = #tpu.core_type<tc>, window_params = [{transform_indices = @transform_0, window_bounds = array<i64: 1, 8>}, {pipeline_mode = #tpu.pipeline_mode<synchronous>, transform_indices = @transform_1, window_bounds = array<i64: 1, 256>}, {pipeline_mode = #tpu.pipeline_mode<synchronous>, transform_indices = @transform_2, window_bounds = array<i64: 1, 256>}, {pipeline_mode = #tpu.pipeline_mode<synchronous>, transform_indices = @transform_3, window_bounds = array<i64: 512, 1024>}, {pipeline_mode = #tpu.pipeline_mode<synchronous>, transform_indices = @transform_4, window_bounds = array<i64: 8, 1024>}, {pipeline_mode = #tpu.pipeline_mode<synchronous>, transform_indices = @transform_5, window_bounds = array<i64: 256, 256>}, {transform_indices = @transform_6, window_bounds = array<i64: 1, 512>}]} {
    %c0_i32 = arith.constant 0 : i32
    %0 = arith.cmpi eq, %arg0, %c0_i32 : i32
    %1 = arith.extui %0 : i1 to i32
    %c0_i32_0 = arith.constant 0 : i32
    %2 = arith.cmpi ne, %1, %c0_i32_0 : i32
    scf.if %2 {
      %c0_25 = arith.constant 0 : index
      %c0_26 = arith.constant 0 : index
      %41 = vector.load %arg2[%c0_25, %c0_26] : memref<1x256xf32, #tpu.memory_space<vmem>>, vector<1x256xf32>
      %c0_27 = arith.constant 0 : index
      %c0_28 = arith.constant 0 : index
      %42 = vector.load %arg8[%c0_27, %c0_28] : memref<1x512xf32, #tpu.memory_space<vmem>>, vector<1x256xf32>
      tpu.vector_store %arg8[%c0_27, %c0_28], %41 {strides = array<i32>} : memref<1x512xf32, #tpu.memory_space<vmem>>, vector<1x256xf32>,
      %c0_29 = arith.constant 0 : index
      %c0_30 = arith.constant 0 : index
      %43 = vector.load %arg3[%c0_29, %c0_30] : memref<1x256xf32, #tpu.memory_space<vmem>>, vector<1x256xf32>
      %c0_31 = arith.constant 0 : index
      %c256_32 = arith.constant 256 : index
      %44 = vector.load %arg8[%c0_31, %c256_32] : memref<1x512xf32, #tpu.memory_space<vmem>>, vector<1x256xf32>
      tpu.vector_store %arg8[%c0_31, %c256_32], %43 {strides = array<i32>} : memref<1x512xf32, #tpu.memory_space<vmem>>, vector<1x256xf32>,
    } else {
    }
    %c0 = arith.constant 0 : index
    %c0_1 = arith.constant 0 : index
    %3 = vector.load %arg1[%c0, %c0_1] : memref<1x8xf32, #tpu.memory_space<vmem>>, vector<1x8xf32>
    %c0_2 = arith.constant 0 : index
    %c0_3 = arith.constant 0 : index
    %4 = vector.load %arg5[%c0_2, %c0_3] : memref<8x1024xf32, #tpu.memory_space<vmem>>, vector<8x1024xf32>
    %cst = arith.constant dense<0.000000e+00> : vector<1x1024xf32>
    %5 = tpu.matmul %3, %4, %cst {dimension_numbers = #tpu.dot_dimension_numbers<[1], [0], [0], [1], [0, 0, 1, 1], [], []>} : vector<1x8xf32>, vector<8x1024xf32>, vector<1x1024xf32> -> vector<1x1024xf32>
    %c0_4 = arith.constant 0 : index
    %c0_5 = arith.constant 0 : index
    %6 = vector.load %arg9[%c0_4, %c0_5] : memref<1x1024xf32, #tpu.memory_space<vmem>>, vector<1x1024xf32>
    tpu.vector_store %arg9[%c0_4, %c0_5], %5 {strides = array<i32>} : memref<1x1024xf32, #tpu.memory_space<vmem>>, vector<1x1024xf32>,
    %c0_6 = arith.constant 0 : index
    %c0_7 = arith.constant 0 : index
    %7 = vector.load %arg4[%c0_6, %c0_7] : memref<512x1024xf32, #tpu.memory_space<vmem>>, vector<512x1024xf32>
    %c0_8 = arith.constant 0 : index
    %c0_9 = arith.constant 0 : index
    %8 = vector.load %arg6[%c0_8, %c0_9] : memref<256x256xf32, #tpu.memory_space<vmem>>, vector<256x256xf32>
    %c0_10 = arith.constant 0 : index
    %c0_11 = arith.constant 0 : index
    %9 = vector.load %arg8[%c0_10, %c0_11] : memref<1x512xf32, #tpu.memory_space<vmem>>, vector<1x512xf32>
    %10 = vector.extract_strided_slice %9 {offsets = [0, 256], sizes = [1, 256], strides = [1, 1]} : vector<1x512xf32> to vector<1x256xf32>
    %c0_12 = arith.constant 0 : index
    %c0_13 = arith.constant 0 : index
    %11 = vector.load %arg9[%c0_12, %c0_13] : memref<1x1024xf32, #tpu.memory_space<vmem>>, vector<1x1024xf32>
    %cst_14 = arith.constant dense<0.000000e+00> : vector<1x1024xf32>
    %12 = tpu.matmul %9, %7, %cst_14 {dimension_numbers = #tpu.dot_dimension_numbers<[1], [0], [0], [1], [0, 0, 1, 1], [], []>} : vector<1x512xf32>, vector<512x1024xf32>, vector<1x1024xf32> -> vector<1x1024xf32>
    %13 = arith.addf %11, %12 : vector<1x1024xf32>
    %14 = vector.extract_strided_slice %13 {offsets = [0, 0], sizes = [1, 512], strides = [1, 1]} : vector<1x1024xf32> to vector<1x512xf32>
    %15 = arith.negf %14 : vector<1x512xf32>
    %16 = math.exp %15 : vector<1x512xf32>
    %cst_15 = arith.constant 1.000000e+00 : f32
    %17 = vector.broadcast %cst_15 : f32 to vector<1x512xf32>
    %18 = arith.addf %17, %16 : vector<1x512xf32>
    %19 = arith.divf %17, %18 : vector<1x512xf32>
    %20 = vector.extract_strided_slice %19 {offsets = [0, 0], sizes = [1, 256], strides = [1, 1]} : vector<1x512xf32> to vector<1x256xf32>
    %21 = vector.extract_strided_slice %19 {offsets = [0, 256], sizes = [1, 256], strides = [1, 1]} : vector<1x512xf32> to vector<1x256xf32>
    %22 = vector.extract_strided_slice %13 {offsets = [0, 512], sizes = [1, 256], strides = [1, 1]} : vector<1x1024xf32> to vector<1x256xf32>
    %23 = math.tanh %22 : vector<1x256xf32>
    %24 = arith.mulf %23, %21 : vector<1x256xf32>
    %25 = arith.mulf %20, %10 : vector<1x256xf32>
    %26 = arith.addf %24, %25 : vector<1x256xf32>
    %27 = vector.extract_strided_slice %13 {offsets = [0, 768], sizes = [1, 256], strides = [1, 1]} : vector<1x1024xf32> to vector<1x256xf32>
    %cst_16 = arith.constant dense<0.000000e+00> : vector<1x256xf32>
    %28 = tpu.matmul %26, %8, %cst_16 {dimension_numbers = #tpu.dot_dimension_numbers<[1], [0], [0], [1], [0, 0, 1, 1], [], []>} : vector<1x256xf32>, vector<256x256xf32>, vector<1x256xf32> -> vector<1x256xf32>
    %29 = arith.addf %27, %28 : vector<1x256xf32>
    %30 = arith.negf %29 : vector<1x256xf32>
    %31 = math.exp %30 : vector<1x256xf32>
    %cst_17 = arith.constant 1.000000e+00 : f32
    %32 = vector.broadcast %cst_17 : f32 to vector<1x256xf32>
    %33 = arith.addf %32, %31 : vector<1x256xf32>
    %34 = arith.divf %32, %33 : vector<1x256xf32>
    %35 = math.tanh %26 : vector<1x256xf32>
    %36 = arith.mulf %34, %35 : vector<1x256xf32>
    %c0_18 = arith.constant 0 : index
    %c0_19 = arith.constant 0 : index
    %37 = vector.load %arg8[%c0_18, %c0_19] : memref<1x512xf32, #tpu.memory_space<vmem>>, vector<1x256xf32>
    tpu.vector_store %arg8[%c0_18, %c0_19], %36 {strides = array<i32>} : memref<1x512xf32, #tpu.memory_space<vmem>>, vector<1x256xf32>,
    %c0_20 = arith.constant 0 : index
    %c256 = arith.constant 256 : index
    %38 = vector.load %arg8[%c0_20, %c256] : memref<1x512xf32, #tpu.memory_space<vmem>>, vector<1x256xf32>
    tpu.vector_store %arg8[%c0_20, %c256], %26 {strides = array<i32>} : memref<1x512xf32, #tpu.memory_space<vmem>>, vector<1x256xf32>,
    %c0_21 = arith.constant 0 : index
    %c0_22 = arith.constant 0 : index
    %39 = vector.load %arg7[%c0_21, %c0_22] : memref<1x512xf32, #tpu.memory_space<vmem>>, vector<1x256xf32>
    tpu.vector_store %arg7[%c0_21, %c0_22], %36 {strides = array<i32>} : memref<1x512xf32, #tpu.memory_space<vmem>>, vector<1x256xf32>,
    %c0_23 = arith.constant 0 : index
    %c256_24 = arith.constant 256 : index
    %40 = vector.load %arg7[%c0_23, %c256_24] : memref<1x512xf32, #tpu.memory_space<vmem>>, vector<1x256xf32>
    tpu.vector_store %arg7[%c0_23, %c256_24], %26 {strides = array<i32>} : memref<1x512xf32, #tpu.memory_space<vmem>>, vector<1x256xf32>,
    return
  }
  func.func @transform_0(%arg0: i32) -> (i32, i32) {
    %c0_i32 = arith.constant 0 : i32
    %c0_i32_0 = arith.constant 0 : i32
    return %arg0, %c0_i32 : i32, i32
  }
  func.func @transform_1(%arg0: i32) -> (i32, i32) {
    %c0_i32 = arith.constant 0 : i32
    %c0_i32_0 = arith.constant 0 : i32
    %c0_i32_1 = arith.constant 0 : i32
    return %c0_i32, %c0_i32_0 : i32, i32
  }
  func.func @transform_2(%arg0: i32) -> (i32, i32) {
    %c0_i32 = arith.constant 0 : i32
    %c0_i32_0 = arith.constant 0 : i32
    %c0_i32_1 = arith.constant 0 : i32
    return %c0_i32, %c0_i32_0 : i32, i32
  }
  func.func @transform_3(%arg0: i32) -> (i32, i32) {
    %c0_i32 = arith.constant 0 : i32
    %c0_i32_0 = arith.constant 0 : i32
    %c0_i32_1 = arith.constant 0 : i32
    return %c0_i32, %c0_i32_0 : i32, i32
  }
  func.func @transform_4(%arg0: i32) -> (i32, i32) {
    %c0_i32 = arith.constant 0 : i32
    %c0_i32_0 = arith.constant 0 : i32
    %c0_i32_1 = arith.constant 0 : i32
    return %c0_i32, %c0_i32_0 : i32, i32
  }
  func.func @transform_5(%arg0: i32) -> (i32, i32) {
    %c0_i32 = arith.constant 0 : i32
    %c0_i32_0 = arith.constant 0 : i32
    %c0_i32_1 = arith.constant 0 : i32
    return %c0_i32, %c0_i32_0 : i32, i32
  }
  func.func @transform_6(%arg0: i32) -> (i32, i32) {
    %c0_i32 = arith.constant 0 : i32
    %c0_i32_0 = arith.constant 0 : i32
    return %arg0, %c0_i32 : i32, i32
  }
}

</mosaic_0001>

<llo_original>
// kernel: lstm_cell_flow_gate_pallas.1
$region0: #{lstm_cell_flow_gate_pallas.1}
  #allocation0 [shape = 'u32[]', space=smem, size = 0x4, offset = 0x4, fixed_abs, tag = 'smem constant byte address 0x4 - core index']
  #allocation1 [shape = 'u32[72,128]{1,0:T(1,128)}', space=vmem, size = 0x9000, scoped, tag = 'internal scratch']
  #allocation2 [shape = 'f32[1,512]{1,0:T(1,128)}', space=vmem, size = 0x800, scoped, tag = 'scratch operand']
  #allocation3 [shape = 'f32[1,1024]{1,0:T(1,128)}', space=vmem, size = 0x1000, scoped, tag = 'scratch operand']
  %s0 = inlined_call_operand.hbm [shape: f32[1,8], index: 0, kind: input, shape index: {}]
  %s1 = inlined_call_operand.hbm [shape: f32[1,256], index: 1, kind: input, shape index: {}]
  %s2 = inlined_call_operand.hbm [shape: f32[1,256], index: 2, kind: input, shape index: {}]
  %s3 = inlined_call_operand.hbm [shape: f32[512,1024], index: 3, kind: input, shape index: {}]
  %s4 = inlined_call_operand.hbm [shape: f32[8,1024], index: 4, kind: input, shape index: {}]
  %s5 = inlined_call_operand.hbm [shape: f32[256,256], index: 5, kind: input, shape index: {}]
  %s6 = inlined_call_operand.vmem [shape: f32[1,512], index: 6, kind: output, shape index: {}]
  %s7 = sld [smem:[#allocation0]]
  $region62: #{lstm_cell_flow_gate_pallas.1} parent=0
    _
  %s9 = ssub.s32 1, %s7
  %s10 = scalar_select 0, %s9, %s7
  $region1: #{lstm_cell_flow_gate_pallas.1} parent=0
    #allocation4 [shape = 'u8[512]{0}', space=vmem, size = 0x400, scoped, tag = 'input window, operand 0, single buffered']
    #allocation5 [shape = 's32[1]{0}', space=sflag, size = 0x4, scoped, tag = 'scoped memory for lstm_cell_flow_gate_pallas.1']
    #allocation6 [shape = 'u8[1024]{0}', space=vmem, size = 0x400, scoped, tag = 'input window, operand 1, single buffered']
    #allocation7 [shape = 's32[1]{0}', space=sflag, size = 0x4, scoped, tag = 'scoped memory for lstm_cell_flow_gate_pallas.1']
    #allocation8 [shape = 'u8[1024]{0}', space=vmem, size = 0x400, scoped, tag = 'input window, operand 2, single buffered']
    #allocation9 [shape = 'u8[2097152]{0}', space=vmem, size = 0x200000, scoped, tag = 'input window, operand 3, single buffered']
    #allocation10 [shape = 's32[1]{0}', space=sflag, size = 0x4, scoped, tag = 'scoped memory for lstm_cell_flow_gate_pallas.1']
    #allocation11 [shape = 'u8[32768]{0}', space=vmem, size = 0x8000, scoped, tag = 'input window, operand 4, single buffered']
    #allocation12 [shape = 'u8[262144]{0}', space=vmem, size = 0x40000, scoped, tag = 'input window, operand 5, single buffered']
    #allocation13 [shape = 's32[1]{0}', space=sflag, size = 0x4, scoped, tag = 'scoped memory for lstm_cell_flow_gate_pallas.1']
    %11 = vsyncpa [#allocation5], 0
    %12 = vsyncpa [#allocation7], 0
    %13 = vsyncpa [#allocation10], 0
    %14 = vsyncpa [#allocation13], 0
    // Predicated region
    $region2: #{lstm_cell_flow_gate_pallas.1} parent=1 // pred_check
      _
    $region3: #{lstm_cell_flow_gate_pallas.1} parent=1 // pred_check_branch
      %16 = sbr.rel (0) target = $region5
    $region4: #{lstm_cell_flow_gate_pallas.1} parent=1 // pred_region
      %18 = vsyncadd [#allocation5], 0
      %s20 = sshll.u32 %s0, 4
      %s21 = int_to_ptr.hbm [resolvable:$true] %s20
      %s22 = sshll.u32 [#allocation4], 4
      %s23 = int_to_ptr.vmem [resolvable:$true] %s22
      %25 = dma.hbm_to_vmem [thread:$0]  %s21, 16, %s23, [#allocation5]
    $region5: #{lstm_cell_flow_gate_pallas.1} parent=1 // pred_fallthru
      _
    // Predicated region
    $region6: #{lstm_cell_flow_gate_pallas.1} parent=1 // pred_check
      _
    $region7: #{lstm_cell_flow_gate_pallas.1} parent=1 // pred_check_branch
      %27 = sbr.rel (0) target = $region9
    $region8: #{lstm_cell_flow_gate_pallas.1} parent=1 // pred_region
      %29 = vsyncadd [#allocation7], 0
      %s31 = sshll.u32 %s1, 4
      %s32 = int_to_ptr.hbm [resolvable:$true] %s31
      %s33 = sshll.u32 [#allocation6], 4
      %s34 = int_to_ptr.vmem [resolvable:$true] %s33
      %36 = dma.hbm_to_vmem [thread:$0]  %s32, 32, %s34, [#allocation7]
    $region9: #{lstm_cell_flow_gate_pallas.1} parent=1 // pred_fallthru
      _
    // Predicated region
    $region10: #{lstm_cell_flow_gate_pallas.1} parent=1 // pred_check
      _
    $region11: #{lstm_cell_flow_gate_pallas.1} parent=1 // pred_check_branch
      %38 = sbr.rel (0) target = $region13
    $region12: #{lstm_cell_flow_gate_pallas.1} parent=1 // pred_region
      %40 = vsyncadd [#allocation7], 0
      %s42 = sshll.u32 %s2, 4
      %s43 = int_to_ptr.hbm [resolvable:$true] %s42
      %s44 = sshll.u32 [#allocation8], 4
      %s45 = int_to_ptr.vmem [resolvable:$true] %s44
      %47 = dma.hbm_to_vmem [thread:$0]  %s43, 32, %s45, [#allocation7]
    $region13: #{lstm_cell_flow_gate_pallas.1} parent=1 // pred_fallthru
      _
    // Predicated region
    $region14: #{lstm_cell_flow_gate_pallas.1} parent=1 // pred_check
      _
    $region15: #{lstm_cell_flow_gate_pallas.1} parent=1 // pred_check_branch
      %49 = sbr.rel (0) target = $region17
    $region16: #{lstm_cell_flow_gate_pallas.1} parent=1 // pred_region
      %51 = vsyncadd [#allocation10], 0
      %s52 = sshll.u32 %s3, 4
      %s53 = int_to_ptr.hbm [resolvable:$true] %s52
      %s54 = sshll.u32 [#allocation9], 4
      %s55 = int_to_ptr.vmem [resolvable:$true] %s54
      %60 = dma.hbm_to_vmem [thread:$0]  %s53, 65536, %s55, [#allocation10], 1024, 1024, 64
    $region17: #{lstm_cell_flow_gate_pallas.1} parent=1 // pred_fallthru
      _
    // Predicated region
    $region18: #{lstm_cell_flow_gate_pallas.1} parent=1 // pred_check
      _
    $region19: #{lstm_cell_flow_gate_pallas.1} parent=1 // pred_check_branch
      %62 = sbr.rel (0) target = $region21
    $region20: #{lstm_cell_flow_gate_pallas.1} parent=1 // pred_region
      %64 = vsyncadd [#allocation10], 0
      %s66 = sshll.u32 %s4, 4
      %s67 = int_to_ptr.hbm [resolvable:$true] %s66
      %s68 = sshll.u32 [#allocation11], 4
      %s69 = int_to_ptr.vmem [resolvable:$true] %s68
      %71 = dma.hbm_to_vmem [thread:$0]  %s67, 1024, %s69, [#allocation10]
    $region21: #{lstm_cell_flow_gate_pallas.1} parent=1 // pred_fallthru
      _
    // Predicated region
    $region22: #{lstm_cell_flow_gate_pallas.1} parent=1 // pred_check
      _
    $region23: #{lstm_cell_flow_gate_pallas.1} parent=1 // pred_check_branch
      %73 = sbr.rel (0) target = $region25
    $region24: #{lstm_cell_flow_gate_pallas.1} parent=1 // pred_region
      %75 = vsyncadd [#allocation13], 0
      %s76 = sshll.u32 %s5, 4
      %s77 = int_to_ptr.hbm [resolvable:$true] %s76
      %s78 = sshll.u32 [#allocation12], 4
      %s79 = int_to_ptr.vmem [resolvable:$true] %s78
      %84 = dma.hbm_to_vmem [thread:$0]  %s77, 8192, %s79, [#allocation13], 256, 256, 16
    $region25: #{lstm_cell_flow_gate_pallas.1} parent=1 // pred_fallthru
      _
    // Predicated region
    $region26: #{lstm_cell_flow_gate_pallas.1} parent=1 // pred_check
      _
    $region27: #{lstm_cell_flow_gate_pallas.1} parent=1 // pred_check_branch
      %86 = sbr.rel (0) target = $region29
    $region28: #{lstm_cell_flow_gate_pallas.1} parent=1 // pred_region
      %88 = dma.done [#allocation5], 16
    $region29: #{lstm_cell_flow_gate_pallas.1} parent=1 // pred_fallthru
      _
    // Predicated region
    $region30: #{lstm_cell_flow_gate_pallas.1} parent=1 // pred_check
      _
    $region31: #{lstm_cell_flow_gate_pallas.1} parent=1 // pred_check_branch
      %90 = sbr.rel (0) target = $region33
    $region32: #{lstm_cell_flow_gate_pallas.1} parent=1 // pred_region
      %92 = dma.done [#allocation7], 32
    $region33: #{lstm_cell_flow_gate_pallas.1} parent=1 // pred_fallthru
      _
    // Predicated region
    $region34: #{lstm_cell_flow_gate_pallas.1} parent=1 // pred_check
      _
    $region35: #{lstm_cell_flow_gate_pallas.1} parent=1 // pred_check_branch
      %94 = sbr.rel (0) target = $region37
    $region36: #{lstm_cell_flow_gate_pallas.1} parent=1 // pred_region
      %96 = dma.done [#allocation7], 32
    $region37: #{lstm_cell_flow_gate_pallas.1} parent=1 // pred_fallthru
      _
    // Predicated region
    $region38: #{lstm_cell_flow_gate_pallas.1} parent=1 // pred_check
      _
    $region39: #{lstm_cell_flow_gate_pallas.1} parent=1 // pred_check_branch
      %98 = sbr.rel (0) target = $region41
    $region40: #{lstm_cell_flow_gate_pallas.1} parent=1 // pred_region
      %100 = dma.done [#allocation10], 65536
    $region41: #{lstm_cell_flow_gate_pallas.1} parent=1 // pred_fallthru
      _
    // Predicated region
    $region42: #{lstm_cell_flow_gate_pallas.1} parent=1 // pred_check
      _
    $region43: #{lstm_cell_flow_gate_pallas.1} parent=1 // pred_check_branch
      %102 = sbr.rel (0) target = $region45
    $region44: #{lstm_cell_flow_gate_pallas.1} parent=1 // pred_region
      %104 = dma.done [#allocation10], 1024
    $region45: #{lstm_cell_flow_gate_pallas.1} parent=1 // pred_fallthru
      _
    // Predicated region
    $region46: #{lstm_cell_flow_gate_pallas.1} parent=1 // pred_check
      _
    $region47: #{lstm_cell_flow_gate_pallas.1} parent=1 // pred_check_branch
      %106 = sbr.rel (0) target = $region49
    $region48: #{lstm_cell_flow_gate_pallas.1} parent=1 // pred_region
      %108 = dma.done [#allocation13], 8192
    $region49: #{lstm_cell_flow_gate_pallas.1} parent=1 // pred_fallthru
      _
    %p109 = scmp.eq.s32.totalorder 0, 0
    // Predicated region
    $region50: #{lstm_cell_flow_gate_pallas.1} parent=1 // pred_check
      %p110 = pneg %p109
    $region51: #{lstm_cell_flow_gate_pallas.1} parent=1 // pred_check_branch
      %112 = sbr.rel (%p110) target = $region53
    $region52: #{lstm_cell_flow_gate_pallas.1} parent=1 // pred_region
      %v113 = vld [vmem:[#allocation6] sm:$0x3]
      %v114 = vlaneseq
      %vm115 = vcmp.ge.s32.totalorder %v114, 0
      %vm116 = vcmp.lt.s32.totalorder %v114, 256
      %vm117 = vmand %vm115, %vm116
      %118 = vst.msk [vmem:[#allocation2] sm:$0x3] %vm117, %v113
      %v119 = vld [vmem:[#allocation8] sm:$0x3]
      %120 = vst.msk [vmem:[#allocation2 + $0x2] sm:$0x3] %vm117, %v119
    $region53: #{lstm_cell_flow_gate_pallas.1} parent=1 // pred_fallthru
      _
    %v121 = vld [vmem:[#allocation4] sm:$0x1]
    %v122 = vld [vmem:[#allocation11] sm:$0xff]
    %v123 = vld [vmem:[#allocation11 + $0x8] sm:$0xff]
    %v124 = vld [vmem:[#allocation11 + $0x10] sm:$0xff]
    %v125 = vld [vmem:[#allocation11 + $0x18] sm:$0xff]
    %v126 = vld [vmem:[#allocation11 + $0x20] sm:$0xff]
    %v127 = vld [vmem:[#allocation11 + $0x28] sm:$0xff]
    %v128 = vld [vmem:[#allocation11 + $0x30] sm:$0xff]
    %v129 = vld [vmem:[#allocation11 + $0x38] sm:$0xff]
    %vm130 = vcmask 64512
    %v132 = vsel %vm130, %v121, 0
    %134 = vmatpush.msra.mxu0 0.0
    %135 = vmatpush.msra.mxu0 0.0
    %136 = vmatpush.msra.mxu0 0.0
    %137 = vmatpush.msra.mxu0 0.0
    %138 = vmatpush.msra.mxu0 0.0
    %139 = vmatpush.msra.mxu0 0.0
    %140 = vmatpush.msra.mxu0 0.0
    %141 = vmatpush.msra.mxu0 0.0
    %142 = vmatpush.msra.mxu0 0.0
    %143 = vmatpush.msra.mxu0 0.0
    %144 = vmatpush.msra.mxu0 0.0
    %145 = vmatpush.msra.mxu0 0.0
    %146 = vmatpush.msra.mxu0 0.0
    %147 = vmatpush.msra.mxu0 0.0
    %148 = vmatpush.msra.mxu0 0.0
    %149 = vmatpush.msra.mxu0 %v122
    %150 = vmatmul.f32.gmra.mxu0 %v132
    %v151 = vpop.f32.mrf.mxu0
    %v152 = vadd.f32 0.0, %v151
    %153 = vdwg.mxu0
    %154 = vmatpush.msra.mxu0 0.0
    %155 = vmatpush.msra.mxu0 0.0
    %156 = vmatpush.msra.mxu0 0.0
    %157 = vmatpush.msra.mxu0 0.0
    %158 = vmatpush.msra.mxu0 0.0
    %159 = vmatpush.msra.mxu0 0.0
    %160 = vmatpush.msra.mxu0 0.0
    %161 = vmatpush.msra.mxu0 0.0
    %162 = vmatpush.msra.mxu0 0.0
    %163 = vmatpush.msra.mxu0 0.0
    %164 = vmatpush.msra.mxu0 0.0
    %165 = vmatpush.msra.mxu0 0.0
    %166 = vmatpush.msra.mxu0 0.0
    %167 = vmatpush.msra.mxu0 0.0
    %168 = vmatpush.msra.mxu0 0.0
    %169 = vmatpush.msra.mxu0 %v123
    %170 = vmatmul.f32.gmra.mxu0 %v132
    %v171 = vpop.f32.mrf.mxu0
    %v172 = vadd.f32 0.0, %v171
    %173 = vdwg.mxu0
    %174 = vmatpush.msra.mxu0 0.0
    %175 = vmatpush.msra.mxu0 0.0
    %176 = vmatpush.msra.mxu0 0.0
    %177 = vmatpush.msra.mxu0 0.0
    %178 = vmatpush.msra.mxu0 0.0
    %179 = vmatpush.msra.mxu0 0.0
    %180 = vmatpush.msra.mxu0 0.0
    %181 = vmatpush.msra.mxu0 0.0
    %182 = vmatpush.msra.mxu0 0.0
    %183 = vmatpush.msra.mxu0 0.0
    %184 = vmatpush.msra.mxu0 0.0
    %185 = vmatpush.msra.mxu0 0.0
    %186 = vmatpush.msra.mxu0 0.0
    %187 = vmatpush.msra.mxu0 0.0
    %188 = vmatpush.msra.mxu0 0.0
    %189 = vmatpush.msra.mxu0 %v124
    %190 = vmatmul.f32.gmra.mxu0 %v132
    %v191 = vpop.f32.mrf.mxu0
    %v192 = vadd.f32 0.0, %v191
    %193 = vdwg.mxu0
    %194 = vmatpush.msra.mxu0 0.0
    %195 = vmatpush.msra.mxu0 0.0
    %196 = vmatpush.msra.mxu0 0.0
    %197 = vmatpush.msra.mxu0 0.0
    %198 = vmatpush.msra.mxu0 0.0
    %199 = vmatpush.msra.mxu0 0.0
    %200 = vmatpush.msra.mxu0 0.0
    %201 = vmatpush.msra.mxu0 0.0
    %202 = vmatpush.msra.mxu0 0.0
    %203 = vmatpush.msra.mxu0 0.0
    %204 = vmatpush.msra.mxu0 0.0
    %205 = vmatpush.msra.mxu0 0.0
    %206 = vmatpush.msra.mxu0 0.0
    %207 = vmatpush.msra.mxu0 0.0
    %208 = vmatpush.msra.mxu0 0.0
    %209 = vmatpush.msra.mxu0 %v125
    %210 = vmatmul.f32.gmra.mxu0 %v132
    %v211 = vpop.f32.mrf.mxu0
    %v212 = vadd.f32 0.0, %v211
    %213 = vdwg.mxu0
    %214 = vmatpush.msra.mxu0 0.0
    %215 = vmatpush.msra.mxu0 0.0
    %216 = vmatpush.msra.mxu0 0.0
    %217 = vmatpush.msra.mxu0 0.0
    %218 = vmatpush.msra.mxu0 0.0
    %219 = vmatpush.msra.mxu0 0.0
    %220 = vmatpush.msra.mxu0 0.0
    %221 = vmatpush.msra.mxu0 0.0
    %222 = vmatpush.msra.mxu0 0.0
    %223 = vmatpush.msra.mxu0 0.0
    %224 = vmatpush.msra.mxu0 0.0
    %225 = vmatpush.msra.mxu0 0.0
    %226 = vmatpush.msra.mxu0 0.0
    %227 = vmatpush.msra.mxu0 0.0
    %228 = vmatpush.msra.mxu0 0.0
    %229 = vmatpush.msra.mxu0 %v126
    %230 = vmatmul.f32.gmra.mxu0 %v132
    %v231 = vpop.f32.mrf.mxu0
    %v232 = vadd.f32 0.0, %v231
    %233 = vdwg.mxu0
    %234 = vmatpush.msra.mxu0 0.0
    %235 = vmatpush.msra.mxu0 0.0
    %236 = vmatpush.msra.mxu0 0.0
    %237 = vmatpush.msra.mxu0 0.0
    %238 = vmatpush.msra.mxu0 0.0
    %239 = vmatpush.msra.mxu0 0.0
    %240 = vmatpush.msra.mxu0 0.0
    %241 = vmatpush.msra.mxu0 0.0
    %242 = vmatpush.msra.mxu0 0.0
    %243 = vmatpush.msra.mxu0 0.0
    %244 = vmatpush.msra.mxu0 0.0
    %245 = vmatpush.msra.mxu0 0.0
    %246 = vmatpush.msra.mxu0 0.0
    %247 = vmatpush.msra.mxu0 0.0
    %248 = vmatpush.msra.mxu0 0.0
    %249 = vmatpush.msra.mxu0 %v127
    %250 = vmatmul.f32.gmra.mxu0 %v132
    %v251 = vpop.f32.mrf.mxu0
    %v252 = vadd.f32 0.0, %v251
    %253 = vdwg.mxu0
    %254 = vmatpush.msra.mxu0 0.0
    %255 = vmatpush.msra.mxu0 0.0
    %256 = vmatpush.msra.mxu0 0.0
    %257 = vmatpush.msra.mxu0 0.0
    %258 = vmatpush.msra.mxu0 0.0
    %259 = vmatpush.msra.mxu0 0.0
    %260 = vmatpush.msra.mxu0 0.0
    %261 = vmatpush.msra.mxu0 0.0
    %262 = vmatpush.msra.mxu0 0.0
    %263 = vmatpush.msra.mxu0 0.0
    %264 = vmatpush.msra.mxu0 0.0
    %265 = vmatpush.msra.mxu0 0.0
    %266 = vmatpush.msra.mxu0 0.0
    %267 = vmatpush.msra.mxu0 0.0
    %268 = vmatpush.msra.mxu0 0.0
    %269 = vmatpush.msra.mxu0 %v128
    %270 = vmatmul.f32.gmra.mxu0 %v132
    %v271 = vpop.f32.mrf.mxu0
    %v272 = vadd.f32 0.0, %v271
    %273 = vdwg.mxu0
    %274 = vmatpush.msra.mxu0 0.0
    %275 = vmatpush.msra.mxu0 0.0
    %276 = vmatpush.msra.mxu0 0.0
    %277 = vmatpush.msra.mxu0 0.0
    %278 = vmatpush.msra.mxu0 0.0
    %279 = vmatpush.msra.mxu0 0.0
    %280 = vmatpush.msra.mxu0 0.0
    %281 = vmatpush.msra.mxu0 0.0
    %282 = vmatpush.msra.mxu0 0.0
    %283 = vmatpush.msra.mxu0 0.0
    %284 = vmatpush.msra.mxu0 0.0
    %285 = vmatpush.msra.mxu0 0.0
    %286 = vmatpush.msra.mxu0 0.0
    %287 = vmatpush.msra.mxu0 0.0
    %288 = vmatpush.msra.mxu0 0.0
    %289 = vmatpush.msra.mxu0 %v129
    %290 = vmatmul.f32.gmra.mxu0 %v132
    %v291 = vpop.f32.mrf.mxu0
    %v292 = vadd.f32 0.0, %v291
    %293 = vdwg.mxu0
    %v302 = vrot.slane %v172, 7
    %v303 = vrot.slane %v192, 6
    %v304 = vrot.slane %v212, 5
    %v305 = vrot.slane %v232, 4
    %v306 = vrot.slane %v252, 3
    %v307 = vrot.slane %v272, 2
    %v308 = vrot.slane %v292, 1
    %vm309 = vcmask 1040384
    %v310 = vsel %vm309, %v152, %v302
    %vm311 = vcmask 1042434
    %v312 = vsel %vm311, %v303, %v304
    %vm313 = vcmask 1041408
    %v314 = vsel %vm313, %v310, %v312
    %vm315 = vcmask 1044484
    %v316 = vsel %vm315, %v305, %v306
    %vm317 = vcmask 1046534
    %v318 = vsel %vm317, %v307, %v308
    %vm319 = vcmask 1045508
    %v320 = vsel %vm319, %v316, %v318
    %vm321 = vcmask 1043456
    %v322 = vsel %vm321, %v314, %v320
    %324 = vst [vmem:[#allocation3] sm:$0xff] %v322
    %v325 = vld [vmem:[#allocation9] sm:$0xff]
    %v326 = vld [vmem:[#allocation9 + $0x8] sm:$0xff]
    %v327 = vld [vmem:[#allocation9 + $0x10] sm:$0xff]
    %v328 = vld [vmem:[#allocation9 + $0x18] sm:$0xff]
    %v329 = vld [vmem:[#allocation9 + $0x20] sm:$0xff]
    %v330 = vld [vmem:[#allocation9 + $0x28] sm:$0xff]
    %v331 = vld [vmem:[#allocation9 + $0x30] sm:$0xff]
    %v332 = vld [vmem:[#allocation9 + $0x38] sm:$0xff]
    %v333 = vld [vmem:[#allocation9 + $0x40] sm:$0xff]
    %v334 = vld [vmem:[#allocation9 + $0x48] sm:$0xff]
    %v335 = vld [vmem:[#allocation9 + $0x50] sm:$0xff]
    %v336 = vld [vmem:[#allocation9 + $0x58] sm:$0xff]
    %v337 = vld [vmem:[#allocation9 + $0x60] sm:$0xff]
    %v338 = vld [vmem:[#allocation9 + $0x68] sm:$0xff]
    %v339 = vld [vmem:[#allocation9 + $0x70] sm:$0xff]
    %v340 = vld [vmem:[#allocation9 + $0x78] sm:$0xff]
    %v341 = vld [vmem:[#allocation9 + $0x80] sm:$0xff]
    %v342 = vld [vmem:[#allocation9 + $0x88] sm:$0xff]
    %v343 = vld [vmem:[#allocation9 + $0x90] sm:$0xff]
    %v344 = vld [vmem:[#allocation9 + $0x98] sm:$0xff]
    %v345 = vld [vmem:[#allocation9 + $0xa0] sm:$0xff]
    %v346 = vld [vmem:[#allocation9 + $0xa8] sm:$0xff]
    %v347 = vld [vmem:[#allocation9 + $0xb0] sm:$0xff]
    %v348 = vld [vmem:[#allocation9 + $0xb8] sm:$0xff]
    %v349 = vld [vmem:[#allocation9 + $0xc0] sm:$0xff]
    %v350 = vld [vmem:[#allocation9 + $0xc8] sm:$0xff]
    %v351 = vld [vmem:[#allocation9 + $0xd0] sm:$0xff]
    %v352 = vld [vmem:[#allocation9 + $0xd8] sm:$0xff]
    %v353 = vld [vmem:[#allocation9 + $0xe0] sm:$0xff]
    %v354 = vld [vmem:[#allocation9 + $0xe8] sm:$0xff]
    %v355 = vld [vmem:[#allocation9 + $0xf0] sm:$0xff]
    %v356 = vld [vmem:[#allocation9 + $0xf8] sm:$0xff]
    %v357 = vld [vmem:[#allocation9 + $0x100] sm:$0xff]
    %v358 = vld [vmem:[#allocation9 + $0x108] sm:$0xff]
    %v359 = vld [vmem:[#allocation9 + $0x110] sm:$0xff]
    %v360 = vld [vmem:[#allocation9 + $0x118] sm:$0xff]
    %v361 = vld [vmem:[#allocation9 + $0x120] sm:$0xff]
    %v362 = vld [vmem:[#allocation9 + $0x128] sm:$0xff]
    %v363 = vld [vmem:[#allocation9 + $0x130] sm:$0xff]
    %v364 = vld [vmem:[#allocation9 + $0x138] sm:$0xff]
    %v365 = vld [vmem:[#allocation9 + $0x140] sm:$0xff]
    %v366 = vld [vmem:[#allocation9 + $0x148] sm:$0xff]
    %v367 = vld [vmem:[#allocation9 + $0x150] sm:$0xff]
    %v368 = vld [vmem:[#allocation9 + $0x158] sm:$0xff]
    %v369 = vld [vmem:[#allocation9 + $0x160] sm:$0xff]
    %v370 = vld [vmem:[#allocation9 + $0x168] sm:$0xff]
    %v371 = vld [vmem:[#allocation9 + $0x170] sm:$0xff]
    %v372 = vld [vmem:[#allocation9 + $0x178] sm:$0xff]
    %v373 = vld [vmem:[#allocation9 + $0x180] sm:$0xff]
    %v374 = vld [vmem:[#allocation9 + $0x188] sm:$0xff]
    %v375 = vld [vmem:[#allocation9 + $0x190] sm:$0xff]
    %v376 = vld [vmem:[#allocation9 + $0x198] sm:$0xff]
    %v377 = vld [vmem:[#allocation9 + $0x1a0] sm:$0xff]
    %v378 = vld [vmem:[#allocation9 + $0x1a8] sm:$0xff]
    %v379 = vld [vmem:[#allocation9 + $0x1b0] sm:$0xff]
    %v380 = vld [vmem:[#allocation9 + $0x1b8] sm:$0xff]
    %v381 = vld [vmem:[#allocation9 + $0x1c0] sm:$0xff]
    %v382 = vld [vmem:[#allocation9 + $0x1c8] sm:$0xff]
    %v383 = vld [vmem:[#allocation9 + $0x1d0] sm:$0xff]
    %v384 = vld [vmem:[#allocation9 + $0x1d8] sm:$0xff]
    %v385 = vld [vmem:[#allocation9 + $0x1e0] sm:$0xff]
    %v386 = vld [vmem:[#allocation9 + $0x1e8] sm:$0xff]
    %v387 = vld [vmem:[#allocation9 + $0x1f0] sm:$0xff]
    %v388 = vld [vmem:[#allocation9 + $0x1f8] sm:$0xff]
    %v389 = vld [vmem:[#allocation9 + $0x200] sm:$0xff]
    %v390 = vld [vmem:[#allocation9 + $0x208] sm:$0xff]
    %v391 = vld [vmem:[#allocation9 + $0x210] sm:$0xff]
    %v392 = vld [vmem:[#allocation9 + $0x218] sm:$0xff]
    %v393 = vld [vmem:[#allocation9 + $0x220] sm:$0xff]
    %v394 = vld [vmem:[#allocation9 + $0x228] sm:$0xff]
    %v395 = vld [vmem:[#allocation9 + $0x230] sm:$0xff]
    %v396 = vld [vmem:[#allocation9 + $0x238] sm:$0xff]
    %v397 = vld [vmem:[#allocation9 + $0x240] sm:$0xff]
    %v398 = vld [vmem:[#allocation9 + $0x248] sm:$0xff]
    %v399 = vld [vmem:[#allocation9 + $0x250] sm:$0xff]
    %v400 = vld [vmem:[#allocation9 + $0x258] sm:$0xff]
    %v401 = vld [vmem:[#allocation9 + $0x260] sm:$0xff]
    %v402 = vld [vmem:[#allocation9 + $0x268] sm:$0xff]
    %v403 = vld [vmem:[#allocation9 + $0x270] sm:$0xff]
    %v404 = vld [vmem:[#allocation9 + $0x278] sm:$0xff]
    %v405 = vld [vmem:[#allocation9 + $0x280] sm:$0xff]
    %v406 = vld [vmem:[#allocation9 + $0x288] sm:$0xff]
    %v407 = vld [vmem:[#allocation9 + $0x290] sm:$0xff]
    %v408 = vld [vmem:[#allocation9 + $0x298] sm:$0xff]
    %v409 = vld [vmem:[#allocation9 + $0x2a0] sm:$0xff]
    %v410 = vld [vmem:[#allocation9 + $0x2a8] sm:$0xff]
    %v411 = vld [vmem:[#allocation9 + $0x2b0] sm:$0xff]
    %v412 = vld [vmem:[#allocation9 + $0x2b8] sm:$0xff]
    %v413 = vld [vmem:[#allocation9 + $0x2c0] sm:$0xff]
    %v414 = vld [vmem:[#allocation9 + $0x2c8] sm:$0xff]
    %v415 = vld [vmem:[#allocation9 + $0x2d0] sm:$0xff]
    %v416 = vld [vmem:[#allocation9 + $0x2d8] sm:$0xff]
    %v417 = vld [vmem:[#allocation9 + $0x2e0] sm:$0xff]
    %v418 = vld [vmem:[#allocation9 + $0x2e8] sm:$0xff]
    %v419 = vld [vmem:[#allocation9 + $0x2f0] sm:$0xff]
    %v420 = vld [vmem:[#allocation9 + $0x2f8] sm:$0xff]
    %v421 = vld [vmem:[#allocation9 + $0x300] sm:$0xff]
    %v422 = vld [vmem:[#allocation9 + $0x308] sm:$0xff]
    %v423 = vld [vmem:[#allocation9 + $0x310] sm:$0xff]
    %v424 = vld [vmem:[#allocation9 + $0x318] sm:$0xff]
    %v425 = vld [vmem:[#allocation9 + $0x320] sm:$0xff]
    %v426 = vld [vmem:[#allocation9 + $0x328] sm:$0xff]
    %v427 = vld [vmem:[#allocation9 + $0x330] sm:$0xff]
    %v428 = vld [vmem:[#allocation9 + $0x338] sm:$0xff]
    %v429 = vld [vmem:[#allocation9 + $0x340] sm:$0xff]
    %v430 = vld [vmem:[#allocation9 + $0x348] sm:$0xff]
    %v431 = vld [vmem:[#allocation9 + $0x350] sm:$0xff]
    %v432 = vld [vmem:[#allocation9 + $0x358] sm:$0xff]
    %v433 = vld [vmem:[#allocation9 + $0x360] sm:$0xff]
    %v434 = vld [vmem:[#allocation9 + $0x368] sm:$0xff]
    %v435 = vld [vmem:[#allocation9 + $0x370] sm:$0xff]
    %v436 = vld [vmem:[#allocation9 + $0x378] sm:$0xff]
    %v437 = vld [vmem:[#allocation9 + $0x380] sm:$0xff]
    %v438 = vld [vmem:[#allocation9 + $0x388] sm:$0xff]
    %v439 = vld [vmem:[#allocation9 + $0x390] sm:$0xff]
    %v440 = vld [vmem:[#allocation9 + $0x398] sm:$0xff]
    %v441 = vld [vmem:[#allocation9 + $0x3a0] sm:$0xff]
    %v442 = vld [vmem:[#allocation9 + $0x3a8] sm:$0xff]
    %v443 = vld [vmem:[#allocation9 + $0x3b0] sm:$0xff]
    %v444 = vld [vmem:[#allocation9 + $0x3b8] sm:$0xff]
    %v445 = vld [vmem:[#allocation9 + $0x3c0] sm:$0xff]
    %v446 = vld [vmem:[#allocation9 + $0x3c8] sm:$0xff]
    %v447 = vld [vmem:[#allocation9 + $0x3d0] sm:$0xff]
    %v448 = vld [vmem:[#allocation9 + $0x3d8] sm:$0xff]
    %v449 = vld [vmem:[#allocation9 + $0x3e0] sm:$0xff]
    %v450 = vld [vmem:[#allocation9 + $0x3e8] sm:$0xff]
    %v451 = vld [vmem:[#allocation9 + $0x3f0] sm:$0xff]
    %v452 = vld [vmem:[#allocation9 + $0x3f8] sm:$0xff]
    %v453 = vld [vmem:[#allocation9 + $0x400] sm:$0xff]
    %v454 = vld [vmem:[#allocation9 + $0x408] sm:$0xff]
    %v455 = vld [vmem:[#allocation9 + $0x410] sm:$0xff]
    %v456 = vld [vmem:[#allocation9 + $0x418] sm:$0xff]
    %v457 = vld [vmem:[#allocation9 + $0x420] sm:$0xff]
    %v458 = vld [vmem:[#allocation9 + $0x428] sm:$0xff]
    %v459 = vld [vmem:[#allocation9 + $0x430] sm:$0xff]
    %v460 = vld [vmem:[#allocation9 + $0x438] sm:$0xff]
    %v461 = vld [vmem:[#allocation9 + $0x440] sm:$0xff]
    %v462 = vld [vmem:[#allocation9 + $0x448] sm:$0xff]
    %v463 = vld [vmem:[#allocation9 + $0x450] sm:$0xff]
    %v464 = vld [vmem:[#allocation9 + $0x458] sm:$0xff]
    %v465 = vld [vmem:[#allocation9 + $0x460] sm:$0xff]
    %v466 = vld [vmem:[#allocation9 + $0x468] sm:$0xff]
    %v467 = vld [vmem:[#allocation9 + $0x470] sm:$0xff]
    %v468 = vld [vmem:[#allocation9 + $0x478] sm:$0xff]
    %v469 = vld [vmem:[#allocation9 + $0x480] sm:$0xff]
    %v470 = vld [vmem:[#allocation9 + $0x488] sm:$0xff]
    %v471 = vld [vmem:[#allocation9 + $0x490] sm:$0xff]
    %v472 = vld [vmem:[#allocation9 + $0x498] sm:$0xff]
    %v473 = vld [vmem:[#allocation9 + $0x4a0] sm:$0xff]
    %v474 = vld [vmem:[#allocation9 + $0x4a8] sm:$0xff]
    %v475 = vld [vmem:[#allocation9 + $0x4b0] sm:$0xff]
    %v476 = vld [vmem:[#allocation9 + $0x4b8] sm:$0xff]
    %v477 = vld [vmem:[#allocation9 + $0x4c0] sm:$0xff]
    %v478 = vld [vmem:[#allocation9 + $0x4c8] sm:$0xff]
    %v479 = vld [vmem:[#allocation9 + $0x4d0] sm:$0xff]
    %v480 = vld [vmem:[#allocation9 + $0x4d8] sm:$0xff]
    %v481 = vld [vmem:[#allocation9 + $0x4e0] sm:$0xff]
    %v482 = vld [vmem:[#allocation9 + $0x4e8] sm:$0xff]
    %v483 = vld [vmem:[#allocation9 + $0x4f0] sm:$0xff]
    %v484 = vld [vmem:[#allocation9 + $0x4f8] sm:$0xff]
    %v485 = vld [vmem:[#allocation9 + $0x500] sm:$0xff]
    %v486 = vld [vmem:[#allocation9 + $0x508] sm:$0xff]
    %v487 = vld [vmem:[#allocation9 + $0x510] sm:$0xff]
    %v488 = vld [vmem:[#allocation9 + $0x518] sm:$0xff]
    %v489 = vld [vmem:[#allocation9 + $0x520] sm:$0xff]
    %v490 = vld [vmem:[#allocation9 + $0x528] sm:$0xff]
    %v491 = vld [vmem:[#allocation9 + $0x530] sm:$0xff]
    %v492 = vld [vmem:[#allocation9 + $0x538] sm:$0xff]
    %v493 = vld [vmem:[#allocation9 + $0x540] sm:$0xff]
    %v494 = vld [vmem:[#allocation9 + $0x548] sm:$0xff]
    %v495 = vld [vmem:[#allocation9 + $0x550] sm:$0xff]
    %v496 = vld [vmem:[#allocation9 + $0x558] sm:$0xff]
    %v497 = vld [vmem:[#allocation9 + $0x560] sm:$0xff]
    %v498 = vld [vmem:[#allocation9 + $0x568] sm:$0xff]
    %v499 = vld [vmem:[#allocation9 + $0x570] sm:$0xff]
    %v500 = vld [vmem:[#allocation9 + $0x578] sm:$0xff]
    %v501 = vld [vmem:[#allocation9 + $0x580] sm:$0xff]
    %v502 = vld [vmem:[#allocation9 + $0x588] sm:$0xff]
    %v503 = vld [vmem:[#allocation9 + $0x590] sm:$0xff]
    %v504 = vld [vmem:[#allocation9 + $0x598] sm:$0xff]
    %v505 = vld [vmem:[#allocation9 + $0x5a0] sm:$0xff]
    %v506 = vld [vmem:[#allocation9 + $0x5a8] sm:$0xff]
    %v507 = vld [vmem:[#allocation9 + $0x5b0] sm:$0xff]
    %v508 = vld [vmem:[#allocation9 + $0x5b8] sm:$0xff]
    %v509 = vld [vmem:[#allocation9 + $0x5c0] sm:$0xff]
    %v510 = vld [vmem:[#allocation9 + $0x5c8] sm:$0xff]
    %v511 = vld [vmem:[#allocation9 + $0x5d0] sm:$0xff]
    %v512 = vld [vmem:[#allocation9 + $0x5d8] sm:$0xff]
    %v513 = vld [vmem:[#allocation9 + $0x5e0] sm:$0xff]
    %v514 = vld [vmem:[#allocation9 + $0x5e8] sm:$0xff]
    %v515 = vld [vmem:[#allocation9 + $0x5f0] sm:$0xff]
    %v516 = vld [vmem:[#allocation9 + $0x5f8] sm:$0xff]
    %v517 = vld [vmem:[#allocation9 + $0x600] sm:$0xff]
    %v518 = vld [vmem:[#allocation9 + $0x608] sm:$0xff]
    %v519 = vld [vmem:[#allocation9 + $0x610] sm:$0xff]
    %v520 = vld [vmem:[#allocation9 + $0x618] sm:$0xff]
    %v521 = vld [vmem:[#allocation9 + $0x620] sm:$0xff]
    %v522 = vld [vmem:[#allocation9 + $0x628] sm:$0xff]
    %v523 = vld [vmem:[#allocation9 + $0x630] sm:$0xff]
    %v524 = vld [vmem:[#allocation9 + $0x638] sm:$0xff]
    %v525 = vld [vmem:[#allocation9 + $0x640] sm:$0xff]
    %v526 = vld [vmem:[#allocation9 + $0x648] sm:$0xff]
    %v527 = vld [vmem:[#allocation9 + $0x650] sm:$0xff]
    %v528 = vld [vmem:[#allocation9 + $0x658] sm:$0xff]
    %v529 = vld [vmem:[#allocation9 + $0x660] sm:$0xff]
    %v530 = vld [vmem:[#allocation9 + $0x668] sm:$0xff]
    %v531 = vld [vmem:[#allocation9 + $0x670] sm:$0xff]
    %v532 = vld [vmem:[#allocation9 + $0x678] sm:$0xff]
    %v533 = vld [vmem:[#allocation9 + $0x680] sm:$0xff]
    %v534 = vld [vmem:[#allocation9 + $0x688] sm:$0xff]
    %v535 = vld [vmem:[#allocation9 + $0x690] sm:$0xff]
    %v536 = vld [vmem:[#allocation9 + $0x698] sm:$0xff]
    %v537 = vld [vmem:[#allocation9 + $0x6a0] sm:$0xff]
    %v538 = vld [vmem:[#allocation9 + $0x6a8] sm:$0xff]
    %v539 = vld [vmem:[#allocation9 + $0x6b0] sm:$0xff]
    %v540 = vld [vmem:[#allocation9 + $0x6b8] sm:$0xff]
    %v541 = vld [vmem:[#allocation9 + $0x6c0] sm:$0xff]
    %v542 = vld [vmem:[#allocation9 + $0x6c8] sm:$0xff]
    %v543 = vld [vmem:[#allocation9 + $0x6d0] sm:$0xff]
    %v544 = vld [vmem:[#allocation9 + $0x6d8] sm:$0xff]
    %v545 = vld [vmem:[#allocation9 + $0x6e0] sm:$0xff]
    %v546 = vld [vmem:[#allocation9 + $0x6e8] sm:$0xff]
    %v547 = vld [vmem:[#allocation9 + $0x6f0] sm:$0xff]
    %v548 = vld [vmem:[#allocation9 + $0x6f8] sm:$0xff]
    %v549 = vld [vmem:[#allocation9 + $0x700] sm:$0xff]
    %v550 = vld [vmem:[#allocation9 + $0x708] sm:$0xff]
    %v551 = vld [vmem:[#allocation9 + $0x710] sm:$0xff]
    %v552 = vld [vmem:[#allocation9 + $0x718] sm:$0xff]
    %v553 = vld [vmem:[#allocation9 + $0x720] sm:$0xff]
    %v554 = vld [vmem:[#allocation9 + $0x728] sm:$0xff]
    %v555 = vld [vmem:[#allocation9 + $0x730] sm:$0xff]
    %v556 = vld [vmem:[#allocation9 + $0x738] sm:$0xff]
    %v557 = vld [vmem:[#allocation9 + $0x740] sm:$0xff]
    %v558 = vld [vmem:[#allocation9 + $0x748] sm:$0xff]
    %v559 = vld [vmem:[#allocation9 + $0x750] sm:$0xff]
    %v560 = vld [vmem:[#allocation9 + $0x758] sm:$0xff]
    %v561 = vld [vmem:[#allocation9 + $0x760] sm:$0xff]
    %v562 = vld [vmem:[#allocation9 + $0x768] sm:$0xff]
    %v563 = vld [vmem:[#allocation9 + $0x770] sm:$0xff]
    %v564 = vld [vmem:[#allocation9 + $0x778] sm:$0xff]
    %v565 = vld [vmem:[#allocation9 + $0x780] sm:$0xff]
    %v566 = vld [vmem:[#allocation9 + $0x788] sm:$0xff]
    %v567 = vld [vmem:[#allocation9 + $0x790] sm:$0xff]
    %v568 = vld [vmem:[#allocation9 + $0x798] sm:$0xff]
    %v569 = vld [vmem:[#allocation9 + $0x7a0] sm:$0xff]
    %v570 = vld [vmem:[#allocation9 + $0x7a8] sm:$0xff]
    %v571 = vld [vmem:[#allocation9 + $0x7b0] sm:$0xff]
    %v572 = vld [vmem:[#allocation9 + $0x7b8] sm:$0xff]
    %v573 = vld [vmem:[#allocation9 + $0x7c0] sm:$0xff]
    %v574 = vld [vmem:[#allocation9 + $0x7c8] sm:$0xff]
    %v575 = vld [vmem:[#allocation9 + $0x7d0] sm:$0xff]
    %v576 = vld [vmem:[#allocation9 + $0x7d8] sm:$0xff]
    %v577 = vld [vmem:[#allocation9 + $0x7e0] sm:$0xff]
    %v578 = vld [vmem:[#allocation9 + $0x7e8] sm:$0xff]
    %v579 = vld [vmem:[#allocation9 + $0x7f0] sm:$0xff]
    %v580 = vld [vmem:[#allocation9 + $0x7f8] sm:$0xff]
    %v581 = vld [vmem:[#allocation9 + $0x800] sm:$0xff]
    %v582 = vld [vmem:[#allocation9 + $0x808] sm:$0xff]
    %v583 = vld [vmem:[#allocation9 + $0x810] sm:$0xff]
    %v584 = vld [vmem:[#allocation9 + $0x818] sm:$0xff]
    %v585 = vld [vmem:[#allocation9 + $0x820] sm:$0xff]
    %v586 = vld [vmem:[#allocation9 + $0x828] sm:$0xff]
    %v587 = vld [vmem:[#allocation9 + $0x830] sm:$0xff]
    %v588 = vld [vmem:[#allocation9 + $0x838] sm:$0xff]
    %v589 = vld [vmem:[#allocation9 + $0x840] sm:$0xff]
    %v590 = vld [vmem:[#allocation9 + $0x848] sm:$0xff]
    %v591 = vld [vmem:[#allocation9 + $0x850] sm:$0xff]
    %v592 = vld [vmem:[#allocation9 + $0x858] sm:$0xff]
    %v593 = vld [vmem:[#allocation9 + $0x860] sm:$0xff]
    %v594 = vld [vmem:[#allocation9 + $0x868] sm:$0xff]
    %v595 = vld [vmem:[#allocation9 + $0x870] sm:$0xff]
    %v596 = vld [vmem:[#allocation9 + $0x878] sm:$0xff]
    %v597 = vld [vmem:[#allocation9 + $0x880] sm:$0xff]
    %v598 = vld [vmem:[#allocation9 + $0x888] sm:$0xff]
    %v599 = vld [vmem:[#allocation9 + $0x890] sm:$0xff]
    %v600 = vld [vmem:[#allocation9 + $0x898] sm:$0xff]
    %v601 = vld [vmem:[#allocation9 + $0x8a0] sm:$0xff]
    %v602 = vld [vmem:[#allocation9 + $0x8a8] sm:$0xff]
    %v603 = vld [vmem:[#allocation9 + $0x8b0] sm:$0xff]
    %v604 = vld [vmem:[#allocation9 + $0x8b8] sm:$0xff]
    %v605 = vld [vmem:[#allocation9 + $0x8c0] sm:$0xff]
    %v606 = vld [vmem:[#allocation9 + $0x8c8] sm:$0xff]
    %v607 = vld [vmem:[#allocation9 + $0x8d0] sm:$0xff]
    %v608 = vld [vmem:[#allocation9 + $0x8d8] sm:$0xff]
    %v609 = vld [vmem:[#allocation9 + $0x8e0] sm:$0xff]
    %v610 = vld [vmem:[#allocation9 + $0x8e8] sm:$0xff]
    %v611 = vld [vmem:[#allocation9 + $0x8f0] sm:$0xff]
    %v612 = vld [vmem:[#allocation9 + $0x8f8] sm:$0xff]
    %v613 = vld [vmem:[#allocation9 + $0x900] sm:$0xff]
    %v614 = vld [vmem:[#allocation9 + $0x908] sm:$0xff]
    %v615 = vld [vmem:[#allocation9 + $0x910] sm:$0xff]
    %v616 = vld [vmem:[#allocation9 + $0x918] sm:$0xff]
    %v617 = vld [vmem:[#allocation9 + $0x920] sm:$0xff]
    %v618 = vld [vmem:[#allocation9 + $0x928] sm:$0xff]
    %v619 = vld [vmem:[#allocation9 + $0x930] sm:$0xff]
    %v620 = vld [vmem:[#allocation9 + $0x938] sm:$0xff]
    %v621 = vld [vmem:[#allocation9 + $0x940] sm:$0xff]
    %v622 = vld [vmem:[#allocation9 + $0x948] sm:$0xff]
    %v623 = vld [vmem:[#allocation9 + $0x950] sm:$0xff]
    %v624 = vld [vmem:[#allocation9 + $0x958] sm:$0xff]
    %v625 = vld [vmem:[#allocation9 + $0x960] sm:$0xff]
    %v626 = vld [vmem:[#allocation9 + $0x968] sm:$0xff]
    %v627 = vld [vmem:[#allocation9 + $0x970] sm:$0xff]
    %v628 = vld [vmem:[#allocation9 + $0x978] sm:$0xff]
    %v629 = vld [vmem:[#allocation9 + $0x980] sm:$0xff]
    %v630 = vld [vmem:[#allocation9 + $0x988] sm:$0xff]
    %v631 = vld [vmem:[#allocation9 + $0x990] sm:$0xff]
    %v632 = vld [vmem:[#allocation9 + $0x998] sm:$0xff]
    %v633 = vld [vmem:[#allocation9 + $0x9a0] sm:$0xff]
    %v634 = vld [vmem:[#allocation9 + $0x9a8] sm:$0xff]
    %v635 = vld [vmem:[#allocation9 + $0x9b0] sm:$0xff]
    %v636 = vld [vmem:[#allocation9 + $0x9b8] sm:$0xff]
    %v637 = vld [vmem:[#allocation9 + $0x9c0] sm:$0xff]
    %v638 = vld [vmem:[#allocation9 + $0x9c8] sm:$0xff]
    %v639 = vld [vmem:[#allocation9 + $0x9d0] sm:$0xff]
    %v640 = vld [vmem:[#allocation9 + $0x9d8] sm:$0xff]
    %v641 = vld [vmem:[#allocation9 + $0x9e0] sm:$0xff]
    %v642 = vld [vmem:[#allocation9 + $0x9e8] sm:$0xff]
    %v643 = vld [vmem:[#allocation9 + $0x9f0] sm:$0xff]
    %v644 = vld [vmem:[#allocation9 + $0x9f8] sm:$0xff]
    %v645 = vld [vmem:[#allocation9 + $0xa00] sm:$0xff]
    %v646 = vld [vmem:[#allocation9 + $0xa08] sm:$0xff]
    %v647 = vld [vmem:[#allocation9 + $0xa10] sm:$0xff]
    %v648 = vld [vmem:[#allocation9 + $0xa18] sm:$0xff]
    %v649 = vld [vmem:[#allocation9 + $0xa20] sm:$0xff]
    %v650 = vld [vmem:[#allocation9 + $0xa28] sm:$0xff]
    %v651 = vld [vmem:[#allocation9 + $0xa30] sm:$0xff]
    %v652 = vld [vmem:[#allocation9 + $0xa38] sm:$0xff]
    %v653 = vld [vmem:[#allocation9 + $0xa40] sm:$0xff]
    %v654 = vld [vmem:[#allocation9 + $0xa48] sm:$0xff]
    %v655 = vld [vmem:[#allocation9 + $0xa50] sm:$0xff]
    %v656 = vld [vmem:[#allocation9 + $0xa58] sm:$0xff]
    %v657 = vld [vmem:[#allocation9 + $0xa60] sm:$0xff]
    %v658 = vld [vmem:[#allocation9 + $0xa68] sm:$0xff]
    %v659 = vld [vmem:[#allocation9 + $0xa70] sm:$0xff]
    %v660 = vld [vmem:[#allocation9 + $0xa78] sm:$0xff]
    %v661 = vld [vmem:[#allocation9 + $0xa80] sm:$0xff]
    %v662 = vld [vmem:[#allocation9 + $0xa88] sm:$0xff]
    %v663 = vld [vmem:[#allocation9 + $0xa90] sm:$0xff]
    %v664 = vld [vmem:[#allocation9 + $0xa98] sm:$0xff]
    %v665 = vld [vmem:[#allocation9 + $0xaa0] sm:$0xff]
    %v666 = vld [vmem:[#allocation9 + $0xaa8] sm:$0xff]
    %v667 = vld [vmem:[#allocation9 + $0xab0] sm:$0xff]
    %v668 = vld [vmem:[#allocation9 + $0xab8] sm:$0xff]
    %v669 = vld [vmem:[#allocation9 + $0xac0] sm:$0xff]
    %v670 = vld [vmem:[#allocation9 + $0xac8] sm:$0xff]
    %v671 = vld [vmem:[#allocation9 + $0xad0] sm:$0xff]
    %v672 = vld [vmem:[#allocation9 + $0xad8] sm:$0xff]
    %v673 = vld [vmem:[#allocation9 + $0xae0] sm:$0xff]
    %v674 = vld [vmem:[#allocation9 + $0xae8] sm:$0xff]
    %v675 = vld [vmem:[#allocation9 + $0xaf0] sm:$0xff]
    %v676 = vld [vmem:[#allocation9 + $0xaf8] sm:$0xff]
    %v677 = vld [vmem:[#allocation9 + $0xb00] sm:$0xff]
    %v678 = vld [vmem:[#allocation9 + $0xb08] sm:$0xff]
    %v679 = vld [vmem:[#allocation9 + $0xb10] sm:$0xff]
    %v680 = vld [vmem:[#allocation9 + $0xb18] sm:$0xff]
    %v681 = vld [vmem:[#allocation9 + $0xb20] sm:$0xff]
    %v682 = vld [vmem:[#allocation9 + $0xb28] sm:$0xff]
    %v683 = vld [vmem:[#allocation9 + $0xb30] sm:$0xff]
    %v684 = vld [vmem:[#allocation9 + $0xb38] sm:$0xff]
    %v685 = vld [vmem:[#allocation9 + $0xb40] sm:$0xff]
    %v686 = vld [vmem:[#allocation9 + $0xb48] sm:$0xff]
    %v687 = vld [vmem:[#allocation9 + $0xb50] sm:$0xff]
    %v688 = vld [vmem:[#allocation9 + $0xb58] sm:$0xff]
    %v689 = vld [vmem:[#allocation9 + $0xb60] sm:$0xff]
    %v690 = vld [vmem:[#allocation9 + $0xb68] sm:$0xff]
    %v691 = vld [vmem:[#allocation9 + $0xb70] sm:$0xff]
    %v692 = vld [vmem:[#allocation9 + $0xb78] sm:$0xff]
    %v693 = vld [vmem:[#allocation9 + $0xb80] sm:$0xff]
    %v694 = vld [vmem:[#allocation9 + $0xb88] sm:$0xff]
    %v695 = vld [vmem:[#allocation9 + $0xb90] sm:$0xff]
    %v696 = vld [vmem:[#allocation9 + $0xb98] sm:$0xff]
    %v697 = vld [vmem:[#allocation9 + $0xba0] sm:$0xff]
    %v698 = vld [vmem:[#allocation9 + $0xba8] sm:$0xff]
    %v699 = vld [vmem:[#allocation9 + $0xbb0] sm:$0xff]
    %v700 = vld [vmem:[#allocation9 + $0xbb8] sm:$0xff]
    %v701 = vld [vmem:[#allocation9 + $0xbc0] sm:$0xff]
    %v702 = vld [vmem:[#allocation9 + $0xbc8] sm:$0xff]
    %v703 = vld [vmem:[#allocation9 + $0xbd0] sm:$0xff]
    %v704 = vld [vmem:[#allocation9 + $0xbd8] sm:$0xff]
    %v705 = vld [vmem:[#allocation9 + $0xbe0] sm:$0xff]
    %v706 = vld [vmem:[#allocation9 + $0xbe8] sm:$0xff]
    %v707 = vld [vmem:[#allocation9 + $0xbf0] sm:$0xff]
    %v708 = vld [vmem:[#allocation9 + $0xbf8] sm:$0xff]
    %v709 = vld [vmem:[#allocation9 + $0xc00] sm:$0xff]
    %v710 = vld [vmem:[#allocation9 + $0xc08] sm:$0xff]
    %v711 = vld [vmem:[#allocation9 + $0xc10] sm:$0xff]
    %v712 = vld [vmem:[#allocation9 + $0xc18] sm:$0xff]
    %v713 = vld [vmem:[#allocation9 + $0xc20] sm:$0xff]
    %v714 = vld [vmem:[#allocation9 + $0xc28] sm:$0xff]
    %v715 = vld [vmem:[#allocation9 + $0xc30] sm:$0xff]
    %v716 = vld [vmem:[#allocation9 + $0xc38] sm:$0xff]
    %v717 = vld [vmem:[#allocation9 + $0xc40] sm:$0xff]
    %v718 = vld [vmem:[#allocation9 + $0xc48] sm:$0xff]
    %v719 = vld [vmem:[#allocation9 + $0xc50] sm:$0xff]
    %v720 = vld [vmem:[#allocation9 + $0xc58] sm:$0xff]
    %v721 = vld [vmem:[#allocation9 + $0xc60] sm:$0xff]
    %v722 = vld [vmem:[#allocation9 + $0xc68] sm:$0xff]
    %v723 = vld [vmem:[#allocation9 + $0xc70] sm:$0xff]
    %v724 = vld [vmem:[#allocation9 + $0xc78] sm:$0xff]
    %v725 = vld [vmem:[#allocation9 + $0xc80] sm:$0xff]
    %v726 = vld [vmem:[#allocation9 + $0xc88] sm:$0xff]
    %v727 = vld [vmem:[#allocation9 + $0xc90] sm:$0xff]
    %v728 = vld [vmem:[#allocation9 + $0xc98] sm:$0xff]
    %v729 = vld [vmem:[#allocation9 + $0xca0] sm:$0xff]
    %v730 = vld [vmem:[#allocation9 + $0xca8] sm:$0xff]
    %v731 = vld [vmem:[#allocation9 + $0xcb0] sm:$0xff]
    %v732 = vld [vmem:[#allocation9 + $0xcb8] sm:$0xff]
    %v733 = vld [vmem:[#allocation9 + $0xcc0] sm:$0xff]
    %v734 = vld [vmem:[#allocation9 + $0xcc8] sm:$0xff]
    %v735 = vld [vmem:[#allocation9 + $0xcd0] sm:$0xff]
    %v736 = vld [vmem:[#allocation9 + $0xcd8] sm:$0xff]
    %v737 = vld [vmem:[#allocation9 + $0xce0] sm:$0xff]
    %v738 = vld [vmem:[#allocation9 + $0xce8] sm:$0xff]
    %v739 = vld [vmem:[#allocation9 + $0xcf0] sm:$0xff]
    %v740 = vld [vmem:[#allocation9 + $0xcf8] sm:$0xff]
    %v741 = vld [vmem:[#allocation9 + $0xd00] sm:$0xff]
    %v742 = vld [vmem:[#allocation9 + $0xd08] sm:$0xff]
    %v743 = vld [vmem:[#allocation9 + $0xd10] sm:$0xff]
    %v744 = vld [vmem:[#allocation9 + $0xd18] sm:$0xff]
    %v745 = vld [vmem:[#allocation9 + $0xd20] sm:$0xff]
    %v746 = vld [vmem:[#allocation9 + $0xd28] sm:$0xff]
    %v747 = vld [vmem:[#allocation9 + $0xd30] sm:$0xff]
    %v748 = vld [vmem:[#allocation9 + $0xd38] sm:$0xff]
    %v749 = vld [vmem:[#allocation9 + $0xd40] sm:$0xff]
    %v750 = vld [vmem:[#allocation9 + $0xd48] sm:$0xff]
    %v751 = vld [vmem:[#allocation9 + $0xd50] sm:$0xff]
    %v752 = vld [vmem:[#allocation9 + $0xd58] sm:$0xff]
    %v753 = vld [vmem:[#allocation9 + $0xd60] sm:$0xff]
    %v754 = vld [vmem:[#allocation9 + $0xd68] sm:$0xff]
    %v755 = vld [vmem:[#allocation9 + $0xd70] sm:$0xff]
    %v756 = vld [vmem:[#allocation9 + $0xd78] sm:$0xff]
    %v757 = vld [vmem:[#allocation9 + $0xd80] sm:$0xff]
    %v758 = vld [vmem:[#allocation9 + $0xd88] sm:$0xff]
    %v759 = vld [vmem:[#allocation9 + $0xd90] sm:$0xff]
    %v760 = vld [vmem:[#allocation9 + $0xd98] sm:$0xff]
    %v761 = vld [vmem:[#allocation9 + $0xda0] sm:$0xff]
    %v762 = vld [vmem:[#allocation9 + $0xda8] sm:$0xff]
    %v763 = vld [vmem:[#allocation9 + $0xdb0] sm:$0xff]
    %v764 = vld [vmem:[#allocation9 + $0xdb8] sm:$0xff]
    %v765 = vld [vmem:[#allocation9 + $0xdc0] sm:$0xff]
    %v766 = vld [vmem:[#allocation9 + $0xdc8] sm:$0xff]
    %v767 = vld [vmem:[#allocation9 + $0xdd0] sm:$0xff]
    %v768 = vld [vmem:[#allocation9 + $0xdd8] sm:$0xff]
    %v769 = vld [vmem:[#allocation9 + $0xde0] sm:$0xff]
    %v770 = vld [vmem:[#allocation9 + $0xde8] sm:$0xff]
    %v771 = vld [vmem:[#allocation9 + $0xdf0] sm:$0xff]
    %v772 = vld [vmem:[#allocation9 + $0xdf8] sm:$0xff]
    %v773 = vld [vmem:[#allocation9 + $0xe00] sm:$0xff]
    %v774 = vld [vmem:[#allocation9 + $0xe08] sm:$0xff]
    %v775 = vld [vmem:[#allocation9 + $0xe10] sm:$0xff]
    %v776 = vld [vmem:[#allocation9 + $0xe18] sm:$0xff]
    %v777 = vld [vmem:[#allocation9 + $0xe20] sm:$0xff]
    %v778 = vld [vmem:[#allocation9 + $0xe28] sm:$0xff]
    %v779 = vld [vmem:[#allocation9 + $0xe30] sm:$0xff]
    %v780 = vld [vmem:[#allocation9 + $0xe38] sm:$0xff]
    %v781 = vld [vmem:[#allocation9 + $0xe40] sm:$0xff]
    %v782 = vld [vmem:[#allocation9 + $0xe48] sm:$0xff]
    %v783 = vld [vmem:[#allocation9 + $0xe50] sm:$0xff]
    %v784 = vld [vmem:[#allocation9 + $0xe58] sm:$0xff]
    %v785 = vld [vmem:[#allocation9 + $0xe60] sm:$0xff]
    %v786 = vld [vmem:[#allocation9 + $0xe68] sm:$0xff]
    %v787 = vld [vmem:[#allocation9 + $0xe70] sm:$0xff]
    %v788 = vld [vmem:[#allocation9 + $0xe78] sm:$0xff]
    %v789 = vld [vmem:[#allocation9 + $0xe80] sm:$0xff]
    %v790 = vld [vmem:[#allocation9 + $0xe88] sm:$0xff]
    %v791 = vld [vmem:[#allocation9 + $0xe90] sm:$0xff]
    %v792 = vld [vmem:[#allocation9 + $0xe98] sm:$0xff]
    %v793 = vld [vmem:[#allocation9 + $0xea0] sm:$0xff]
    %v794 = vld [vmem:[#allocation9 + $0xea8] sm:$0xff]
    %v795 = vld [vmem:[#allocation9 + $0xeb0] sm:$0xff]
    %v796 = vld [vmem:[#allocation9 + $0xeb8] sm:$0xff]
    %v797 = vld [vmem:[#allocation9 + $0xec0] sm:$0xff]
    %v798 = vld [vmem:[#allocation9 + $0xec8] sm:$0xff]
    %v799 = vld [vmem:[#allocation9 + $0xed0] sm:$0xff]
    %v800 = vld [vmem:[#allocation9 + $0xed8] sm:$0xff]
    %v801 = vld [vmem:[#allocation9 + $0xee0] sm:$0xff]
    %v802 = vld [vmem:[#allocation9 + $0xee8] sm:$0xff]
    %v803 = vld [vmem:[#allocation9 + $0xef0] sm:$0xff]
    %v804 = vld [vmem:[#allocation9 + $0xef8] sm:$0xff]
    %v805 = vld [vmem:[#allocation9 + $0xf00] sm:$0xff]
    %v806 = vld [vmem:[#allocation9 + $0xf08] sm:$0xff]
    %v807 = vld [vmem:[#allocation9 + $0xf10] sm:$0xff]
    %v808 = vld [vmem:[#allocation9 + $0xf18] sm:$0xff]
    %v809 = vld [vmem:[#allocation9 + $0xf20] sm:$0xff]
    %v810 = vld [vmem:[#allocation9 + $0xf28] sm:$0xff]
    %v811 = vld [vmem:[#allocation9 + $0xf30] sm:$0xff]
    %v812 = vld [vmem:[#allocation9 + $0xf38] sm:$0xff]
    %v813 = vld [vmem:[#allocation9 + $0xf40] sm:$0xff]
    %v814 = vld [vmem:[#allocation9 + $0xf48] sm:$0xff]
    %v815 = vld [vmem:[#allocation9 + $0xf50] sm:$0xff]
    %v816 = vld [vmem:[#allocation9 + $0xf58] sm:$0xff]
    %v817 = vld [vmem:[#allocation9 + $0xf60] sm:$0xff]
    %v818 = vld [vmem:[#allocation9 + $0xf68] sm:$0xff]
    %v819 = vld [vmem:[#allocation9 + $0xf70] sm:$0xff]
    %v820 = vld [vmem:[#allocation9 + $0xf78] sm:$0xff]
    %v821 = vld [vmem:[#allocation9 + $0xf80] sm:$0xff]
    %v822 = vld [vmem:[#allocation9 + $0xf88] sm:$0xff]
    %v823 = vld [vmem:[#allocation9 + $0xf90] sm:$0xff]
    %v824 = vld [vmem:[#allocation9 + $0xf98] sm:$0xff]
    %v825 = vld [vmem:[#allocation9 + $0xfa0] sm:$0xff]
    %v826 = vld [vmem:[#allocation9 + $0xfa8] sm:$0xff]
    %v827 = vld [vmem:[#allocation9 + $0xfb0] sm:$0xff]
    %v828 = vld [vmem:[#allocation9 + $0xfb8] sm:$0xff]
    %v829 = vld [vmem:[#allocation9 + $0xfc0] sm:$0xff]
    %v830 = vld [vmem:[#allocation9 + $0xfc8] sm:$0xff]
    %v831 = vld [vmem:[#allocation9 + $0xfd0] sm:$0xff]
    %v832 = vld [vmem:[#allocation9 + $0xfd8] sm:$0xff]
    %v833 = vld [vmem:[#allocation9 + $0xfe0] sm:$0xff]
    %v834 = vld [vmem:[#allocation9 + $0xfe8] sm:$0xff]
    %v835 = vld [vmem:[#allocation9 + $0xff0] sm:$0xff]
    %v836 = vld [vmem:[#allocation9 + $0xff8] sm:$0xff]
    %v837 = vld [vmem:[#allocation12] sm:$0xff]
    %v838 = vld [vmem:[#allocation12 + $0x8] sm:$0xff]
    %v839 = vld [vmem:[#allocation12 + $0x10] sm:$0xff]
    %v840 = vld [vmem:[#allocation12 + $0x18] sm:$0xff]
    %v841 = vld [vmem:[#allocation12 + $0x20] sm:$0xff]
    %v842 = vld [vmem:[#allocation12 + $0x28] sm:$0xff]
    %v843 = vld [vmem:[#allocation12 + $0x30] sm:$0xff]
    %v844 = vld [vmem:[#allocation12 + $0x38] sm:$0xff]
    %v845 = vld [vmem:[#allocation12 + $0x40] sm:$0xff]
    %v846 = vld [vmem:[#allocation12 + $0x48] sm:$0xff]
    %v847 = vld [vmem:[#allocation12 + $0x50] sm:$0xff]
    %v848 = vld [vmem:[#allocation12 + $0x58] sm:$0xff]
    %v849 = vld [vmem:[#allocation12 + $0x60] sm:$0xff]
    %v850 = vld [vmem:[#allocation12 + $0x68] sm:$0xff]
    %v851 = vld [vmem:[#allocation12 + $0x70] sm:$0xff]
    %v852 = vld [vmem:[#allocation12 + $0x78] sm:$0xff]
    %v853 = vld [vmem:[#allocation12 + $0x80] sm:$0xff]
    %v854 = vld [vmem:[#allocation12 + $0x88] sm:$0xff]
    %v855 = vld [vmem:[#allocation12 + $0x90] sm:$0xff]
    %v856 = vld [vmem:[#allocation12 + $0x98] sm:$0xff]
    %v857 = vld [vmem:[#allocation12 + $0xa0] sm:$0xff]
    %v858 = vld [vmem:[#allocation12 + $0xa8] sm:$0xff]
    %v859 = vld [vmem:[#allocation12 + $0xb0] sm:$0xff]
    %v860 = vld [vmem:[#allocation12 + $0xb8] sm:$0xff]
    %v861 = vld [vmem:[#allocation12 + $0xc0] sm:$0xff]
    %v862 = vld [vmem:[#allocation12 + $0xc8] sm:$0xff]
    %v863 = vld [vmem:[#allocation12 + $0xd0] sm:$0xff]
    %v864 = vld [vmem:[#allocation12 + $0xd8] sm:$0xff]
    %v865 = vld [vmem:[#allocation12 + $0xe0] sm:$0xff]
    %v866 = vld [vmem:[#allocation12 + $0xe8] sm:$0xff]
    %v867 = vld [vmem:[#allocation12 + $0xf0] sm:$0xff]
    %v868 = vld [vmem:[#allocation12 + $0xf8] sm:$0xff]
    %v869 = vld [vmem:[#allocation12 + $0x100] sm:$0xff]
    %v870 = vld [vmem:[#allocation12 + $0x108] sm:$0xff]
    %v871 = vld [vmem:[#allocation12 + $0x110] sm:$0xff]
    %v872 = vld [vmem:[#allocation12 + $0x118] sm:$0xff]
    %v873 = vld [vmem:[#allocation12 + $0x120] sm:$0xff]
    %v874 = vld [vmem:[#allocation12 + $0x128] sm:$0xff]
    %v875 = vld [vmem:[#allocation12 + $0x130] sm:$0xff]
    %v876 = vld [vmem:[#allocation12 + $0x138] sm:$0xff]
    %v877 = vld [vmem:[#allocation12 + $0x140] sm:$0xff]
    %v878 = vld [vmem:[#allocation12 + $0x148] sm:$0xff]
    %v879 = vld [vmem:[#allocation12 + $0x150] sm:$0xff]
    %v880 = vld [vmem:[#allocation12 + $0x158] sm:$0xff]
    %v881 = vld [vmem:[#allocation12 + $0x160] sm:$0xff]
    %v882 = vld [vmem:[#allocation12 + $0x168] sm:$0xff]
    %v883 = vld [vmem:[#allocation12 + $0x170] sm:$0xff]
    %v884 = vld [vmem:[#allocation12 + $0x178] sm:$0xff]
    %v885 = vld [vmem:[#allocation12 + $0x180] sm:$0xff]
    %v886 = vld [vmem:[#allocation12 + $0x188] sm:$0xff]
    %v887 = vld [vmem:[#allocation12 + $0x190] sm:$0xff]
    %v888 = vld [vmem:[#allocation12 + $0x198] sm:$0xff]
    %v889 = vld [vmem:[#allocation12 + $0x1a0] sm:$0xff]
    %v890 = vld [vmem:[#allocation12 + $0x1a8] sm:$0xff]
    %v891 = vld [vmem:[#allocation12 + $0x1b0] sm:$0xff]
    %v892 = vld [vmem:[#allocation12 + $0x1b8] sm:$0xff]
    %v893 = vld [vmem:[#allocation12 + $0x1c0] sm:$0xff]
    %v894 = vld [vmem:[#allocation12 + $0x1c8] sm:$0xff]
    %v895 = vld [vmem:[#allocation12 + $0x1d0] sm:$0xff]
    %v896 = vld [vmem:[#allocation12 + $0x1d8] sm:$0xff]
    %v897 = vld [vmem:[#allocation12 + $0x1e0] sm:$0xff]
    %v898 = vld [vmem:[#allocation12 + $0x1e8] sm:$0xff]
    %v899 = vld [vmem:[#allocation12 + $0x1f0] sm:$0xff]
    %v900 = vld [vmem:[#allocation12 + $0x1f8] sm:$0xff]
    %v901 = vld [vmem:[#allocation2] sm:$0xf]
    %v902 = vld [vmem:[#allocation3] sm:$0xff]
    %v904 = vperm.slane %v901, 0
    %v905 = vperm.slane %v901, 1
    %v906 = vperm.slane %v901, 2
    %v907 = vperm.slane %v901, 3
    %912 = vmatpush.msra.mxu0 %v445
    %913 = vmatpush.msra.mxu0 %v437
    %914 = vmatpush.msra.mxu0 %v429
    %915 = vmatpush.msra.mxu0 %v421
    %916 = vmatpush.msra.mxu0 %v413
    %917 = vmatpush.msra.mxu0 %v405
    %918 = vmatpush.msra.mxu0 %v397
    %919 = vmatpush.msra.mxu0 %v389
    %920 = vmatpush.msra.mxu0 %v381
    %921 = vmatpush.msra.mxu0 %v373
    %922 = vmatpush.msra.mxu0 %v365
    %923 = vmatpush.msra.mxu0 %v357
    %924 = vmatpush.msra.mxu0 %v349
    %925 = vmatpush.msra.mxu0 %v341
    %926 = vmatpush.msra.mxu0 %v333
    %927 = vmatpush.msra.mxu0 %v325
    %928 = vmatmul.f32.gmra.mxu0 %v904
    %v929 = vpop.f32.mrf.mxu0
    %v930 = vadd.f32 0.0, %v929
    %931 = vdwg.mxu0
    %932 = vmatpush.msra.mxu0 %v573
    %933 = vmatpush.msra.mxu0 %v565
    %934 = vmatpush.msra.mxu0 %v557
    %935 = vmatpush.msra.mxu0 %v549
    %936 = vmatpush.msra.mxu0 %v541
    %937 = vmatpush.msra.mxu0 %v533
    %938 = vmatpush.msra.mxu0 %v525
    %939 = vmatpush.msra.mxu0 %v517
    %940 = vmatpush.msra.mxu0 %v509
    %941 = vmatpush.msra.mxu0 %v501
    %942 = vmatpush.msra.mxu0 %v493
    %943 = vmatpush.msra.mxu0 %v485
    %944 = vmatpush.msra.mxu0 %v477
    %945 = vmatpush.msra.mxu0 %v469
    %946 = vmatpush.msra.mxu0 %v461
    %947 = vmatpush.msra.mxu0 %v453
    %948 = vmatmul.f32.gmra.mxu0 %v905
    %v949 = vpop.f32.mrf.mxu0
    %v950 = vadd.f32 %v930, %v949
    %951 = vdwg.mxu0
    %952 = vmatpush.msra.mxu0 %v701
    %953 = vmatpush.msra.mxu0 %v693
    %954 = vmatpush.msra.mxu0 %v685
    %955 = vmatpush.msra.mxu0 %v677
    %956 = vmatpush.msra.mxu0 %v669
    %957 = vmatpush.msra.mxu0 %v661
    %958 = vmatpush.msra.mxu0 %v653
    %959 = vmatpush.msra.mxu0 %v645
    %960 = vmatpush.msra.mxu0 %v637
    %961 = vmatpush.msra.mxu0 %v629
    %962 = vmatpush.msra.mxu0 %v621
    %963 = vmatpush.msra.mxu0 %v613
    %964 = vmatpush.msra.mxu0 %v605
    %965 = vmatpush.msra.mxu0 %v597
    %966 = vmatpush.msra.mxu0 %v589
    %967 = vmatpush.msra.mxu0 %v581
    %968 = vmatmul.f32.gmra.mxu0 %v906
    %v969 = vpop.f32.mrf.mxu0
    %v970 = vadd.f32 %v950, %v969
    %971 = vdwg.mxu0
    %972 = vmatpush.msra.mxu0 %v829
    %973 = vmatpush.msra.mxu0 %v821
    %974 = vmatpush.msra.mxu0 %v813
    %975 = vmatpush.msra.mxu0 %v805
    %976 = vmatpush.msra.mxu0 %v797
    %977 = vmatpush.msra.mxu0 %v789
    %978 = vmatpush.msra.mxu0 %v781
    %979 = vmatpush.msra.mxu0 %v773
    %980 = vmatpush.msra.mxu0 %v765
    %981 = vmatpush.msra.mxu0 %v757
    %982 = vmatpush.msra.mxu0 %v749
    %983 = vmatpush.msra.mxu0 %v741
    %984 = vmatpush.msra.mxu0 %v733
    %985 = vmatpush.msra.mxu0 %v725
    %986 = vmatpush.msra.mxu0 %v717
    %987 = vmatpush.msra.mxu0 %v709
    %988 = vmatmul.f32.gmra.mxu0 %v907
    %v989 = vpop.f32.mrf.mxu0
    %v990 = vadd.f32 %v970, %v989
    %991 = vdwg.mxu0
    %992 = vmatpush.msra.mxu0 %v446
    %993 = vmatpush.msra.mxu0 %v438
    %994 = vmatpush.msra.mxu0 %v430
    %995 = vmatpush.msra.mxu0 %v422
    %996 = vmatpush.msra.mxu0 %v414
    %997 = vmatpush.msra.mxu0 %v406
    %998 = vmatpush.msra.mxu0 %v398
    %999 = vmatpush.msra.mxu0 %v390
    %1000 = vmatpush.msra.mxu0 %v382
    %1001 = vmatpush.msra.mxu0 %v374
    %1002 = vmatpush.msra.mxu0 %v366
    %1003 = vmatpush.msra.mxu0 %v358
    %1004 = vmatpush.msra.mxu0 %v350
    %1005 = vmatpush.msra.mxu0 %v342
    %1006 = vmatpush.msra.mxu0 %v334
    %1007 = vmatpush.msra.mxu0 %v326
    %1008 = vmatmul.f32.gmra.mxu0 %v904
    %v1009 = vpop.f32.mrf.mxu0
    %v1010 = vadd.f32 0.0, %v1009
    %1011 = vdwg.mxu0
    %1012 = vmatpush.msra.mxu0 %v574
    %1013 = vmatpush.msra.mxu0 %v566
    %1014 = vmatpush.msra.mxu0 %v558
    %1015 = vmatpush.msra.mxu0 %v550
    %1016 = vmatpush.msra.mxu0 %v542
    %1017 = vmatpush.msra.mxu0 %v534
    %1018 = vmatpush.msra.mxu0 %v526
    %1019 = vmatpush.msra.mxu0 %v518
    %1020 = vmatpush.msra.mxu0 %v510
    %1021 = vmatpush.msra.mxu0 %v502
    %1022 = vmatpush.msra.mxu0 %v494
    %1023 = vmatpush.msra.mxu0 %v486
    %1024 = vmatpush.msra.mxu0 %v478
    %1025 = vmatpush.msra.mxu0 %v470
    %1026 = vmatpush.msra.mxu0 %v462
    %1027 = vmatpush.msra.mxu0 %v454
    %1028 = vmatmul.f32.gmra.mxu0 %v905
    %v1029 = vpop.f32.mrf.mxu0
    %v1030 = vadd.f32 %v1010, %v1029
    %1031 = vdwg.mxu0
    %1032 = vmatpush.msra.mxu0 %v702
    %1033 = vmatpush.msra.mxu0 %v694
    %1034 = vmatpush.msra.mxu0 %v686
    %1035 = vmatpush.msra.mxu0 %v678
    %1036 = vmatpush.msra.mxu0 %v670
    %1037 = vmatpush.msra.mxu0 %v662
    %1038 = vmatpush.msra.mxu0 %v654
    %1039 = vmatpush.msra.mxu0 %v646
    %1040 = vmatpush.msra.mxu0 %v638
    %1041 = vmatpush.msra.mxu0 %v630
    %1042 = vmatpush.msra.mxu0 %v622
    %1043 = vmatpush.msra.mxu0 %v614
    %1044 = vmatpush.msra.mxu0 %v606
    %1045 = vmatpush.msra.mxu0 %v598
    %1046 = vmatpush.msra.mxu0 %v590
    %1047 = vmatpush.msra.mxu0 %v582
    %1048 = vmatmul.f32.gmra.mxu0 %v906
    %v1049 = vpop.f32.mrf.mxu0
    %v1050 = vadd.f32 %v1030, %v1049
    %1051 = vdwg.mxu0
    %1052 = vmatpush.msra.mxu0 %v830
    %1053 = vmatpush.msra.mxu0 %v822
    %1054 = vmatpush.msra.mxu0 %v814
    %1055 = vmatpush.msra.mxu0 %v806
    %1056 = vmatpush.msra.mxu0 %v798
    %1057 = vmatpush.msra.mxu0 %v790
    %1058 = vmatpush.msra.mxu0 %v782
    %1059 = vmatpush.msra.mxu0 %v774
    %1060 = vmatpush.msra.mxu0 %v766
    %1061 = vmatpush.msra.mxu0 %v758
    %1062 = vmatpush.msra.mxu0 %v750
    %1063 = vmatpush.msra.mxu0 %v742
    %1064 = vmatpush.msra.mxu0 %v734
    %1065 = vmatpush.msra.mxu0 %v726
    %1066 = vmatpush.msra.mxu0 %v718
    %1067 = vmatpush.msra.mxu0 %v710
    %1068 = vmatmul.f32.gmra.mxu0 %v907
    %v1069 = vpop.f32.mrf.mxu0
    %v1070 = vadd.f32 %v1050, %v1069
    %1071 = vdwg.mxu0
    %1072 = vmatpush.msra.mxu0 %v447
    %1073 = vmatpush.msra.mxu0 %v439
    %1074 = vmatpush.msra.mxu0 %v431
    %1075 = vmatpush.msra.mxu0 %v423
    %1076 = vmatpush.msra.mxu0 %v415
    %1077 = vmatpush.msra.mxu0 %v407
    %1078 = vmatpush.msra.mxu0 %v399
    %1079 = vmatpush.msra.mxu0 %v391
    %1080 = vmatpush.msra.mxu0 %v383
    %1081 = vmatpush.msra.mxu0 %v375
    %1082 = vmatpush.msra.mxu0 %v367
    %1083 = vmatpush.msra.mxu0 %v359
    %1084 = vmatpush.msra.mxu0 %v351
    %1085 = vmatpush.msra.mxu0 %v343
    %1086 = vmatpush.msra.mxu0 %v335
    %1087 = vmatpush.msra.mxu0 %v327
    %1088 = vmatmul.f32.gmra.mxu0 %v904
    %v1089 = vpop.f32.mrf.mxu0
    %v1090 = vadd.f32 0.0, %v1089
    %1091 = vdwg.mxu0
    %1092 = vmatpush.msra.mxu0 %v575
    %1093 = vmatpush.msra.mxu0 %v567
    %1094 = vmatpush.msra.mxu0 %v559
    %1095 = vmatpush.msra.mxu0 %v551
    %1096 = vmatpush.msra.mxu0 %v543
    %1097 = vmatpush.msra.mxu0 %v535
    %1098 = vmatpush.msra.mxu0 %v527
    %1099 = vmatpush.msra.mxu0 %v519
    %1100 = vmatpush.msra.mxu0 %v511
    %1101 = vmatpush.msra.mxu0 %v503
    %1102 = vmatpush.msra.mxu0 %v495
    %1103 = vmatpush.msra.mxu0 %v487
    %1104 = vmatpush.msra.mxu0 %v479
    %1105 = vmatpush.msra.mxu0 %v471
    %1106 = vmatpush.msra.mxu0 %v463
    %1107 = vmatpush.msra.mxu0 %v455
    %1108 = vmatmul.f32.gmra.mxu0 %v905
    %v1109 = vpop.f32.mrf.mxu0
    %v1110 = vadd.f32 %v1090, %v1109
    %1111 = vdwg.mxu0
    %1112 = vmatpush.msra.mxu0 %v703
    %1113 = vmatpush.msra.mxu0 %v695
    %1114 = vmatpush.msra.mxu0 %v687
    %1115 = vmatpush.msra.mxu0 %v679
    %1116 = vmatpush.msra.mxu0 %v671
    %1117 = vmatpush.msra.mxu0 %v663
    %1118 = vmatpush.msra.mxu0 %v655
    %1119 = vmatpush.msra.mxu0 %v647
    %1120 = vmatpush.msra.mxu0 %v639
    %1121 = vmatpush.msra.mxu0 %v631
    %1122 = vmatpush.msra.mxu0 %v623
    %1123 = vmatpush.msra.mxu0 %v615
    %1124 = vmatpush.msra.mxu0 %v607
    %1125 = vmatpush.msra.mxu0 %v599
    %1126 = vmatpush.msra.mxu0 %v591
    %1127 = vmatpush.msra.mxu0 %v583
    %1128 = vmatmul.f32.gmra.mxu0 %v906
    %v1129 = vpop.f32.mrf.mxu0
    %v1130 = vadd.f32 %v1110, %v1129
    %1131 = vdwg.mxu0
    %1132 = vmatpush.msra.mxu0 %v831
    %1133 = vmatpush.msra.mxu0 %v823
    %1134 = vmatpush.msra.mxu0 %v815
    %1135 = vmatpush.msra.mxu0 %v807
    %1136 = vmatpush.msra.mxu0 %v799
    %1137 = vmatpush.msra.mxu0 %v791
    %1138 = vmatpush.msra.mxu0 %v783
    %1139 = vmatpush.msra.mxu0 %v775
    %1140 = vmatpush.msra.mxu0 %v767
    %1141 = vmatpush.msra.mxu0 %v759
    %1142 = vmatpush.msra.mxu0 %v751
    %1143 = vmatpush.msra.mxu0 %v743
    %1144 = vmatpush.msra.mxu0 %v735
    %1145 = vmatpush.msra.mxu0 %v727
    %1146 = vmatpush.msra.mxu0 %v719
    %1147 = vmatpush.msra.mxu0 %v711
    %1148 = vmatmul.f32.gmra.mxu0 %v907
    %v1149 = vpop.f32.mrf.mxu0
    %v1150 = vadd.f32 %v1130, %v1149
    %1151 = vdwg.mxu0
    %1152 = vmatpush.msra.mxu0 %v448
    %1153 = vmatpush.msra.mxu0 %v440
    %1154 = vmatpush.msra.mxu0 %v432
    %1155 = vmatpush.msra.mxu0 %v424
    %1156 = vmatpush.msra.mxu0 %v416
    %1157 = vmatpush.msra.mxu0 %v408
    %1158 = vmatpush.msra.mxu0 %v400
    %1159 = vmatpush.msra.mxu0 %v392
    %1160 = vmatpush.msra.mxu0 %v384
    %1161 = vmatpush.msra.mxu0 %v376
    %1162 = vmatpush.msra.mxu0 %v368
    %1163 = vmatpush.msra.mxu0 %v360
    %1164 = vmatpush.msra.mxu0 %v352
    %1165 = vmatpush.msra.mxu0 %v344
    %1166 = vmatpush.msra.mxu0 %v336
    %1167 = vmatpush.msra.mxu0 %v328
    %1168 = vmatmul.f32.gmra.mxu0 %v904
    %v1169 = vpop.f32.mrf.mxu0
    %v1170 = vadd.f32 0.0, %v1169
    %1171 = vdwg.mxu0
    %1172 = vmatpush.msra.mxu0 %v576
    %1173 = vmatpush.msra.mxu0 %v568
    %1174 = vmatpush.msra.mxu0 %v560
    %1175 = vmatpush.msra.mxu0 %v552
    %1176 = vmatpush.msra.mxu0 %v544
    %1177 = vmatpush.msra.mxu0 %v536
    %1178 = vmatpush.msra.mxu0 %v528
    %1179 = vmatpush.msra.mxu0 %v520
    %1180 = vmatpush.msra.mxu0 %v512
    %1181 = vmatpush.msra.mxu0 %v504
    %1182 = vmatpush.msra.mxu0 %v496
    %1183 = vmatpush.msra.mxu0 %v488
    %1184 = vmatpush.msra.mxu0 %v480
    %1185 = vmatpush.msra.mxu0 %v472
    %1186 = vmatpush.msra.mxu0 %v464
    %1187 = vmatpush.msra.mxu0 %v456
    %1188 = vmatmul.f32.gmra.mxu0 %v905
    %v1189 = vpop.f32.mrf.mxu0
    %v1190 = vadd.f32 %v1170, %v1189
    %1191 = vdwg.mxu0
    %1192 = vmatpush.msra.mxu0 %v704
    %1193 = vmatpush.msra.mxu0 %v696
    %1194 = vmatpush.msra.mxu0 %v688
    %1195 = vmatpush.msra.mxu0 %v680
    %1196 = vmatpush.msra.mxu0 %v672
    %1197 = vmatpush.msra.mxu0 %v664
    %1198 = vmatpush.msra.mxu0 %v656
    %1199 = vmatpush.msra.mxu0 %v648
    %1200 = vmatpush.msra.mxu0 %v640
    %1201 = vmatpush.msra.mxu0 %v632
    %1202 = vmatpush.msra.mxu0 %v624
    %1203 = vmatpush.msra.mxu0 %v616
    %1204 = vmatpush.msra.mxu0 %v608
    %1205 = vmatpush.msra.mxu0 %v600
    %1206 = vmatpush.msra.mxu0 %v592
    %1207 = vmatpush.msra.mxu0 %v584
    %1208 = vmatmul.f32.gmra.mxu0 %v906
    %v1209 = vpop.f32.mrf.mxu0
    %v1210 = vadd.f32 %v1190, %v1209
    %1211 = vdwg.mxu0
    %1212 = vmatpush.msra.mxu0 %v832
    %1213 = vmatpush.msra.mxu0 %v824
    %1214 = vmatpush.msra.mxu0 %v816
    %1215 = vmatpush.msra.mxu0 %v808
    %1216 = vmatpush.msra.mxu0 %v800
    %1217 = vmatpush.msra.mxu0 %v792
    %1218 = vmatpush.msra.mxu0 %v784
    %1219 = vmatpush.msra.mxu0 %v776
    %1220 = vmatpush.msra.mxu0 %v768
    %1221 = vmatpush.msra.mxu0 %v760
    %1222 = vmatpush.msra.mxu0 %v752
    %1223 = vmatpush.msra.mxu0 %v744
    %1224 = vmatpush.msra.mxu0 %v736
    %1225 = vmatpush.msra.mxu0 %v728
    %1226 = vmatpush.msra.mxu0 %v720
    %1227 = vmatpush.msra.mxu0 %v712
    %1228 = vmatmul.f32.gmra.mxu0 %v907
    %v1229 = vpop.f32.mrf.mxu0
    %v1230 = vadd.f32 %v1210, %v1229
    %1231 = vdwg.mxu0
    %1232 = vmatpush.msra.mxu0 %v449
    %1233 = vmatpush.msra.mxu0 %v441
    %1234 = vmatpush.msra.mxu0 %v433
    %1235 = vmatpush.msra.mxu0 %v425
    %1236 = vmatpush.msra.mxu0 %v417
    %1237 = vmatpush.msra.mxu0 %v409
    %1238 = vmatpush.msra.mxu0 %v401
    %1239 = vmatpush.msra.mxu0 %v393
    %1240 = vmatpush.msra.mxu0 %v385
    %1241 = vmatpush.msra.mxu0 %v377
    %1242 = vmatpush.msra.mxu0 %v369
    %1243 = vmatpush.msra.mxu0 %v361
    %1244 = vmatpush.msra.mxu0 %v353
    %1245 = vmatpush.msra.mxu0 %v345
    %1246 = vmatpush.msra.mxu0 %v337
    %1247 = vmatpush.msra.mxu0 %v329
    %1248 = vmatmul.f32.gmra.mxu0 %v904
    %v1249 = vpop.f32.mrf.mxu0
    %v1250 = vadd.f32 0.0, %v1249
    %1251 = vdwg.mxu0
    %1252 = vmatpush.msra.mxu0 %v577
    %1253 = vmatpush.msra.mxu0 %v569
    %1254 = vmatpush.msra.mxu0 %v561
    %1255 = vmatpush.msra.mxu0 %v553
    %1256 = vmatpush.msra.mxu0 %v545
    %1257 = vmatpush.msra.mxu0 %v537
    %1258 = vmatpush.msra.mxu0 %v529
    %1259 = vmatpush.msra.mxu0 %v521
    %1260 = vmatpush.msra.mxu0 %v513
    %1261 = vmatpush.msra.mxu0 %v505
    %1262 = vmatpush.msra.mxu0 %v497
    %1263 = vmatpush.msra.mxu0 %v489
    %1264 = vmatpush.msra.mxu0 %v481
    %1265 = vmatpush.msra.mxu0 %v473
    %1266 = vmatpush.msra.mxu0 %v465
    %1267 = vmatpush.msra.mxu0 %v457
    %1268 = vmatmul.f32.gmra.mxu0 %v905
    %v1269 = vpop.f32.mrf.mxu0
    %v1270 = vadd.f32 %v1250, %v1269
    %1271 = vdwg.mxu0
    %1272 = vmatpush.msra.mxu0 %v705
    %1273 = vmatpush.msra.mxu0 %v697
    %1274 = vmatpush.msra.mxu0 %v689
    %1275 = vmatpush.msra.mxu0 %v681
    %1276 = vmatpush.msra.mxu0 %v673
    %1277 = vmatpush.msra.mxu0 %v665
    %1278 = vmatpush.msra.mxu0 %v657
    %1279 = vmatpush.msra.mxu0 %v649
    %1280 = vmatpush.msra.mxu0 %v641
    %1281 = vmatpush.msra.mxu0 %v633
    %1282 = vmatpush.msra.mxu0 %v625
    %1283 = vmatpush.msra.mxu0 %v617
    %1284 = vmatpush.msra.mxu0 %v609
    %1285 = vmatpush.msra.mxu0 %v601
    %1286 = vmatpush.msra.mxu0 %v593
    %1287 = vmatpush.msra.mxu0 %v585
    %1288 = vmatmul.f32.gmra.mxu0 %v906
    %v1289 = vpop.f32.mrf.mxu0
    %v1290 = vadd.f32 %v1270, %v1289
    %1291 = vdwg.mxu0
    %1292 = vmatpush.msra.mxu0 %v833
    %1293 = vmatpush.msra.mxu0 %v825
    %1294 = vmatpush.msra.mxu0 %v817
    %1295 = vmatpush.msra.mxu0 %v809
    %1296 = vmatpush.msra.mxu0 %v801
    %1297 = vmatpush.msra.mxu0 %v793
    %1298 = vmatpush.msra.mxu0 %v785
    %1299 = vmatpush.msra.mxu0 %v777
    %1300 = vmatpush.msra.mxu0 %v769
    %1301 = vmatpush.msra.mxu0 %v761
    %1302 = vmatpush.msra.mxu0 %v753
    %1303 = vmatpush.msra.mxu0 %v745
    %1304 = vmatpush.msra.mxu0 %v737
    %1305 = vmatpush.msra.mxu0 %v729
    %1306 = vmatpush.msra.mxu0 %v721
    %1307 = vmatpush.msra.mxu0 %v713
    %1308 = vmatmul.f32.gmra.mxu0 %v907
    %v1309 = vpop.f32.mrf.mxu0
    %v1310 = vadd.f32 %v1290, %v1309
    %1311 = vdwg.mxu0
    %1312 = vmatpush.msra.mxu0 %v450
    %1313 = vmatpush.msra.mxu0 %v442
    %1314 = vmatpush.msra.mxu0 %v434
    %1315 = vmatpush.msra.mxu0 %v426
    %1316 = vmatpush.msra.mxu0 %v418
    %1317 = vmatpush.msra.mxu0 %v410
    %1318 = vmatpush.msra.mxu0 %v402
    %1319 = vmatpush.msra.mxu0 %v394
    %1320 = vmatpush.msra.mxu0 %v386
    %1321 = vmatpush.msra.mxu0 %v378
    %1322 = vmatpush.msra.mxu0 %v370
    %1323 = vmatpush.msra.mxu0 %v362
    %1324 = vmatpush.msra.mxu0 %v354
    %1325 = vmatpush.msra.mxu0 %v346
    %1326 = vmatpush.msra.mxu0 %v338
    %1327 = vmatpush.msra.mxu0 %v330
    %1328 = vmatmul.f32.gmra.mxu0 %v904
    %v1329 = vpop.f32.mrf.mxu0
    %v1330 = vadd.f32 0.0, %v1329
    %1331 = vdwg.mxu0
    %1332 = vmatpush.msra.mxu0 %v578
    %1333 = vmatpush.msra.mxu0 %v570
    %1334 = vmatpush.msra.mxu0 %v562
    %1335 = vmatpush.msra.mxu0 %v554
    %1336 = vmatpush.msra.mxu0 %v546
    %1337 = vmatpush.msra.mxu0 %v538
    %1338 = vmatpush.msra.mxu0 %v530
    %1339 = vmatpush.msra.mxu0 %v522
    %1340 = vmatpush.msra.mxu0 %v514
    %1341 = vmatpush.msra.mxu0 %v506
    %1342 = vmatpush.msra.mxu0 %v498
    %1343 = vmatpush.msra.mxu0 %v490
    %1344 = vmatpush.msra.mxu0 %v482
    %1345 = vmatpush.msra.mxu0 %v474
    %1346 = vmatpush.msra.mxu0 %v466
    %1347 = vmatpush.msra.mxu0 %v458
    %1348 = vmatmul.f32.gmra.mxu0 %v905
    %v1349 = vpop.f32.mrf.mxu0
    %v1350 = vadd.f32 %v1330, %v1349
    %1351 = vdwg.mxu0
    %1352 = vmatpush.msra.mxu0 %v706
    %1353 = vmatpush.msra.mxu0 %v698
    %1354 = vmatpush.msra.mxu0 %v690
    %1355 = vmatpush.msra.mxu0 %v682
    %1356 = vmatpush.msra.mxu0 %v674
    %1357 = vmatpush.msra.mxu0 %v666
    %1358 = vmatpush.msra.mxu0 %v658
    %1359 = vmatpush.msra.mxu0 %v650
    %1360 = vmatpush.msra.mxu0 %v642
    %1361 = vmatpush.msra.mxu0 %v634
    %1362 = vmatpush.msra.mxu0 %v626
    %1363 = vmatpush.msra.mxu0 %v618
    %1364 = vmatpush.msra.mxu0 %v610
    %1365 = vmatpush.msra.mxu0 %v602
    %1366 = vmatpush.msra.mxu0 %v594
    %1367 = vmatpush.msra.mxu0 %v586
    %1368 = vmatmul.f32.gmra.mxu0 %v906
    %v1369 = vpop.f32.mrf.mxu0
    %v1370 = vadd.f32 %v1350, %v1369
    %1371 = vdwg.mxu0
    %1372 = vmatpush.msra.mxu0 %v834
    %1373 = vmatpush.msra.mxu0 %v826
    %1374 = vmatpush.msra.mxu0 %v818
    %1375 = vmatpush.msra.mxu0 %v810
    %1376 = vmatpush.msra.mxu0 %v802
    %1377 = vmatpush.msra.mxu0 %v794
    %1378 = vmatpush.msra.mxu0 %v786
    %1379 = vmatpush.msra.mxu0 %v778
    %1380 = vmatpush.msra.mxu0 %v770
    %1381 = vmatpush.msra.mxu0 %v762
    %1382 = vmatpush.msra.mxu0 %v754
    %1383 = vmatpush.msra.mxu0 %v746
    %1384 = vmatpush.msra.mxu0 %v738
    %1385 = vmatpush.msra.mxu0 %v730
    %1386 = vmatpush.msra.mxu0 %v722
    %1387 = vmatpush.msra.mxu0 %v714
    %1388 = vmatmul.f32.gmra.mxu0 %v907
    %v1389 = vpop.f32.mrf.mxu0
    %v1390 = vadd.f32 %v1370, %v1389
    %1391 = vdwg.mxu0
    %1392 = vmatpush.msra.mxu0 %v451
    %1393 = vmatpush.msra.mxu0 %v443
    %1394 = vmatpush.msra.mxu0 %v435
    %1395 = vmatpush.msra.mxu0 %v427
    %1396 = vmatpush.msra.mxu0 %v419
    %1397 = vmatpush.msra.mxu0 %v411
    %1398 = vmatpush.msra.mxu0 %v403
    %1399 = vmatpush.msra.mxu0 %v395
    %1400 = vmatpush.msra.mxu0 %v387
    %1401 = vmatpush.msra.mxu0 %v379
    %1402 = vmatpush.msra.mxu0 %v371
    %1403 = vmatpush.msra.mxu0 %v363
    %1404 = vmatpush.msra.mxu0 %v355
    %1405 = vmatpush.msra.mxu0 %v347
    %1406 = vmatpush.msra.mxu0 %v339
    %1407 = vmatpush.msra.mxu0 %v331
    %1408 = vmatmul.f32.gmra.mxu0 %v904
    %v1409 = vpop.f32.mrf.mxu0
    %v1410 = vadd.f32 0.0, %v1409
    %1411 = vdwg.mxu0
    %1412 = vmatpush.msra.mxu0 %v579
    %1413 = vmatpush.msra.mxu0 %v571
    %1414 = vmatpush.msra.mxu0 %v563
    %1415 = vmatpush.msra.mxu0 %v555
    %1416 = vmatpush.msra.mxu0 %v547
    %1417 = vmatpush.msra.mxu0 %v539
    %1418 = vmatpush.msra.mxu0 %v531
    %1419 = vmatpush.msra.mxu0 %v523
    %1420 = vmatpush.msra.mxu0 %v515
    %1421 = vmatpush.msra.mxu0 %v507
    %1422 = vmatpush.msra.mxu0 %v499
    %1423 = vmatpush.msra.mxu0 %v491
    %1424 = vmatpush.msra.mxu0 %v483
    %1425 = vmatpush.msra.mxu0 %v475
    %1426 = vmatpush.msra.mxu0 %v467
    %1427 = vmatpush.msra.mxu0 %v459
    %1428 = vmatmul.f32.gmra.mxu0 %v905
    %v1429 = vpop.f32.mrf.mxu0
    %v1430 = vadd.f32 %v1410, %v1429
    %1431 = vdwg.mxu0
    %1432 = vmatpush.msra.mxu0 %v707
    %1433 = vmatpush.msra.mxu0 %v699
    %1434 = vmatpush.msra.mxu0 %v691
    %1435 = vmatpush.msra.mxu0 %v683
    %1436 = vmatpush.msra.mxu0 %v675
    %1437 = vmatpush.msra.mxu0 %v667
    %1438 = vmatpush.msra.mxu0 %v659
    %1439 = vmatpush.msra.mxu0 %v651
    %1440 = vmatpush.msra.mxu0 %v643
    %1441 = vmatpush.msra.mxu0 %v635
    %1442 = vmatpush.msra.mxu0 %v627
    %1443 = vmatpush.msra.mxu0 %v619
    %1444 = vmatpush.msra.mxu0 %v611
    %1445 = vmatpush.msra.mxu0 %v603
    %1446 = vmatpush.msra.mxu0 %v595
    %1447 = vmatpush.msra.mxu0 %v587
    %1448 = vmatmul.f32.gmra.mxu0 %v906
    %v1449 = vpop.f32.mrf.mxu0
    %v1450 = vadd.f32 %v1430, %v1449
    %1451 = vdwg.mxu0
    %1452 = vmatpush.msra.mxu0 %v835
    %1453 = vmatpush.msra.mxu0 %v827
    %1454 = vmatpush.msra.mxu0 %v819
    %1455 = vmatpush.msra.mxu0 %v811
    %1456 = vmatpush.msra.mxu0 %v803
    %1457 = vmatpush.msra.mxu0 %v795
    %1458 = vmatpush.msra.mxu0 %v787
    %1459 = vmatpush.msra.mxu0 %v779
    %1460 = vmatpush.msra.mxu0 %v771
    %1461 = vmatpush.msra.mxu0 %v763
    %1462 = vmatpush.msra.mxu0 %v755
    %1463 = vmatpush.msra.mxu0 %v747
    %1464 = vmatpush.msra.mxu0 %v739
    %1465 = vmatpush.msra.mxu0 %v731
    %1466 = vmatpush.msra.mxu0 %v723
    %1467 = vmatpush.msra.mxu0 %v715
    %1468 = vmatmul.f32.gmra.mxu0 %v907
    %v1469 = vpop.f32.mrf.mxu0
    %v1470 = vadd.f32 %v1450, %v1469
    %1471 = vdwg.mxu0
    %1472 = vmatpush.msra.mxu0 %v452
    %1473 = vmatpush.msra.mxu0 %v444
    %1474 = vmatpush.msra.mxu0 %v436
    %1475 = vmatpush.msra.mxu0 %v428
    %1476 = vmatpush.msra.mxu0 %v420
    %1477 = vmatpush.msra.mxu0 %v412
    %1478 = vmatpush.msra.mxu0 %v404
    %1479 = vmatpush.msra.mxu0 %v396
    %1480 = vmatpush.msra.mxu0 %v388
    %1481 = vmatpush.msra.mxu0 %v380
    %1482 = vmatpush.msra.mxu0 %v372
    %1483 = vmatpush.msra.mxu0 %v364
    %1484 = vmatpush.msra.mxu0 %v356
    %1485 = vmatpush.msra.mxu0 %v348
    %1486 = vmatpush.msra.mxu0 %v340
    %1487 = vmatpush.msra.mxu0 %v332
    %1488 = vmatmul.f32.gmra.mxu0 %v904
    %v1489 = vpop.f32.mrf.mxu0
    %v1490 = vadd.f32 0.0, %v1489
    %1491 = vdwg.mxu0
    %1492 = vmatpush.msra.mxu0 %v580
    %1493 = vmatpush.msra.mxu0 %v572
    %1494 = vmatpush.msra.mxu0 %v564
    %1495 = vmatpush.msra.mxu0 %v556
    %1496 = vmatpush.msra.mxu0 %v548
    %1497 = vmatpush.msra.mxu0 %v540
    %1498 = vmatpush.msra.mxu0 %v532
    %1499 = vmatpush.msra.mxu0 %v524
    %1500 = vmatpush.msra.mxu0 %v516
    %1501 = vmatpush.msra.mxu0 %v508
    %1502 = vmatpush.msra.mxu0 %v500
    %1503 = vmatpush.msra.mxu0 %v492
    %1504 = vmatpush.msra.mxu0 %v484
    %1505 = vmatpush.msra.mxu0 %v476
    %1506 = vmatpush.msra.mxu0 %v468
    %1507 = vmatpush.msra.mxu0 %v460
    %1508 = vmatmul.f32.gmra.mxu0 %v905
    %v1509 = vpop.f32.mrf.mxu0
    %v1510 = vadd.f32 %v1490, %v1509
    %1511 = vdwg.mxu0
    %1512 = vmatpush.msra.mxu0 %v708
    %1513 = vmatpush.msra.mxu0 %v700
    %1514 = vmatpush.msra.mxu0 %v692
    %1515 = vmatpush.msra.mxu0 %v684
    %1516 = vmatpush.msra.mxu0 %v676
    %1517 = vmatpush.msra.mxu0 %v668
    %1518 = vmatpush.msra.mxu0 %v660
    %1519 = vmatpush.msra.mxu0 %v652
    %1520 = vmatpush.msra.mxu0 %v644
    %1521 = vmatpush.msra.mxu0 %v636
    %1522 = vmatpush.msra.mxu0 %v628
    %1523 = vmatpush.msra.mxu0 %v620
    %1524 = vmatpush.msra.mxu0 %v612
    %1525 = vmatpush.msra.mxu0 %v604
    %1526 = vmatpush.msra.mxu0 %v596
    %1527 = vmatpush.msra.mxu0 %v588
    %1528 = vmatmul.f32.gmra.mxu0 %v906
    %v1529 = vpop.f32.mrf.mxu0
    %v1530 = vadd.f32 %v1510, %v1529
    %1531 = vdwg.mxu0
    %1532 = vmatpush.msra.mxu0 %v836
    %1533 = vmatpush.msra.mxu0 %v828
    %1534 = vmatpush.msra.mxu0 %v820
    %1535 = vmatpush.msra.mxu0 %v812
    %1536 = vmatpush.msra.mxu0 %v804
    %1537 = vmatpush.msra.mxu0 %v796
    %1538 = vmatpush.msra.mxu0 %v788
    %1539 = vmatpush.msra.mxu0 %v780
    %1540 = vmatpush.msra.mxu0 %v772
    %1541 = vmatpush.msra.mxu0 %v764
    %1542 = vmatpush.msra.mxu0 %v756
    %1543 = vmatpush.msra.mxu0 %v748
    %1544 = vmatpush.msra.mxu0 %v740
    %1545 = vmatpush.msra.mxu0 %v732
    %1546 = vmatpush.msra.mxu0 %v724
    %1547 = vmatpush.msra.mxu0 %v716
    %1548 = vmatmul.f32.gmra.mxu0 %v907
    %v1549 = vpop.f32.mrf.mxu0
    %v1550 = vadd.f32 %v1530, %v1549
    %1551 = vdwg.mxu0
    %v1560 = vrot.slane %v1070, 7
    %v1561 = vrot.slane %v1150, 6
    %v1562 = vrot.slane %v1230, 5
    %v1563 = vrot.slane %v1310, 4
    %v1564 = vrot.slane %v1390, 3
    %v1565 = vrot.slane %v1470, 2
    %v1566 = vrot.slane %v1550, 1
    %v1567 = vsel %vm309, %v990, %v1560
    %v1568 = vsel %vm311, %v1561, %v1562
    %v1569 = vsel %vm313, %v1567, %v1568
    %v1570 = vsel %vm315, %v1563, %v1564
    %v1571 = vsel %vm317, %v1565, %v1566
    %v1572 = vsel %vm319, %v1570, %v1571
    %v1573 = vsel %vm321, %v1569, %v1572
    %v1575 = vadd.f32 %v902, %v1573
    %v1576 = vxor.u32 %v1575, 2147483648
    %v1577 = vmul.f32 %v1576, 1.442695
    %v1578 = vpow.pop %v1577
    %v1579 = vadd.f32 %v1578, 1.0
    %v1580 = vrcp.pop %v1579
    %v1581 = vmul.f32 %v1579, %v1580
    %v1582 = vsub.f32 1.0, %v1581
    %v1583 = vmul.f32 %v1580, %v1582
    %v1584 = vadd.f32 %v1580, %v1583
    %vm1585 = vweird.f32 %v1579
    %vm1586 = vweird.f32 %v1580
    %vm1587 = vmor %vm1585, %vm1586
    %v1588 = vsel %vm1587, %v1580, %v1584
    %v1589 = vand.u32 2147483647, %v1579
    %vm1590 = vcmp.eq.f32.partialorder %v1589, 8.507059e+37
    %v1591 = vand.u32 %v1579, 2147483648
    %v1592 = vor.u32 1.1754944e-38, %v1591
    %v1593 = vsel %vm1590, %v1592, %v1588
    %v1594 = vmul.f32 1.0, %v1593
    %v1596 = vrot.slane %v1575, 4
    %v1598 = vtanh.pop %v1596
    %v1600 = vrot.slane %v1594, 2
    %v1602 = vmul.f32 %v1598, %v1600
    %v1603 = vrot.slane %v901, 2
    %v1605 = vmul.f32 %v1594, %v1603
    %v1606 = vadd.f32 %v1602, %v1605
    %v1608 = vperm.slane %v1606, 0
    %v1609 = vperm.slane %v1606, 1
    %1612 = vmatpush.msra.mxu0 %v867
    %1613 = vmatpush.msra.mxu0 %v865
    %1614 = vmatpush.msra.mxu0 %v863
    %1615 = vmatpush.msra.mxu0 %v861
    %1616 = vmatpush.msra.mxu0 %v859
    %1617 = vmatpush.msra.mxu0 %v857
    %1618 = vmatpush.msra.mxu0 %v855
    %1619 = vmatpush.msra.mxu0 %v853
    %1620 = vmatpush.msra.mxu0 %v851
    %1621 = vmatpush.msra.mxu0 %v849
    %1622 = vmatpush.msra.mxu0 %v847
    %1623 = vmatpush.msra.mxu0 %v845
    %1624 = vmatpush.msra.mxu0 %v843
    %1625 = vmatpush.msra.mxu0 %v841
    %1626 = vmatpush.msra.mxu0 %v839
    %1627 = vmatpush.msra.mxu0 %v837
    %1628 = vmatmul.f32.gmra.mxu0 %v1608
    %v1629 = vpop.f32.mrf.mxu0
    %v1630 = vadd.f32 0.0, %v1629
    %1631 = vdwg.mxu0
    %1632 = vmatpush.msra.mxu0 %v899
    %1633 = vmatpush.msra.mxu0 %v897
    %1634 = vmatpush.msra.mxu0 %v895
    %1635 = vmatpush.msra.mxu0 %v893
    %1636 = vmatpush.msra.mxu0 %v891
    %1637 = vmatpush.msra.mxu0 %v889
    %1638 = vmatpush.msra.mxu0 %v887
    %1639 = vmatpush.msra.mxu0 %v885
    %1640 = vmatpush.msra.mxu0 %v883
    %1641 = vmatpush.msra.mxu0 %v881
    %1642 = vmatpush.msra.mxu0 %v879
    %1643 = vmatpush.msra.mxu0 %v877
    %1644 = vmatpush.msra.mxu0 %v875
    %1645 = vmatpush.msra.mxu0 %v873
    %1646 = vmatpush.msra.mxu0 %v871
    %1647 = vmatpush.msra.mxu0 %v869
    %1648 = vmatmul.f32.gmra.mxu0 %v1609
    %v1649 = vpop.f32.mrf.mxu0
    %v1650 = vadd.f32 %v1630, %v1649
    %1651 = vdwg.mxu0
    %1652 = vmatpush.msra.mxu0 %v868
    %1653 = vmatpush.msra.mxu0 %v866
    %1654 = vmatpush.msra.mxu0 %v864
    %1655 = vmatpush.msra.mxu0 %v862
    %1656 = vmatpush.msra.mxu0 %v860
    %1657 = vmatpush.msra.mxu0 %v858
    %1658 = vmatpush.msra.mxu0 %v856
    %1659 = vmatpush.msra.mxu0 %v854
    %1660 = vmatpush.msra.mxu0 %v852
    %1661 = vmatpush.msra.mxu0 %v850
    %1662 = vmatpush.msra.mxu0 %v848
    %1663 = vmatpush.msra.mxu0 %v846
    %1664 = vmatpush.msra.mxu0 %v844
    %1665 = vmatpush.msra.mxu0 %v842
    %1666 = vmatpush.msra.mxu0 %v840
    %1667 = vmatpush.msra.mxu0 %v838
    %1668 = vmatmul.f32.gmra.mxu0 %v1608
    %v1669 = vpop.f32.mrf.mxu0
    %v1670 = vadd.f32 0.0, %v1669
    %1671 = vdwg.mxu0
    %1672 = vmatpush.msra.mxu0 %v900
    %1673 = vmatpush.msra.mxu0 %v898
    %1674 = vmatpush.msra.mxu0 %v896
    %1675 = vmatpush.msra.mxu0 %v894
    %1676 = vmatpush.msra.mxu0 %v892
    %1677 = vmatpush.msra.mxu0 %v890
    %1678 = vmatpush.msra.mxu0 %v888
    %1679 = vmatpush.msra.mxu0 %v886
    %1680 = vmatpush.msra.mxu0 %v884
    %1681 = vmatpush.msra.mxu0 %v882
    %1682 = vmatpush.msra.mxu0 %v880
    %1683 = vmatpush.msra.mxu0 %v878
    %1684 = vmatpush.msra.mxu0 %v876
    %1685 = vmatpush.msra.mxu0 %v874
    %1686 = vmatpush.msra.mxu0 %v872
    %1687 = vmatpush.msra.mxu0 %v870
    %1688 = vmatmul.f32.gmra.mxu0 %v1609
    %v1689 = vpop.f32.mrf.mxu0
    %v1690 = vadd.f32 %v1670, %v1689
    %1691 = vdwg.mxu0
    %v1692 = vrot.slane %v1575, 6
    %v1696 = vrot.slane %v1690, 7
    %v1697 = vsel %vm309, %v1650, %v1696
    %v1699 = vadd.f32 %v1692, %v1697
    %v1700 = vxor.u32 %v1699, 2147483648
    %v1701 = vmul.f32 %v1700, 1.442695
    %v1702 = vpow.pop %v1701
    %v1703 = vadd.f32 %v1702, 1.0
    %v1704 = vrcp.pop %v1703
    %v1705 = vmul.f32 %v1703, %v1704
    %v1706 = vsub.f32 1.0, %v1705
    %v1707 = vmul.f32 %v1704, %v1706
    %v1708 = vadd.f32 %v1704, %v1707
    %vm1709 = vweird.f32 %v1703
    %vm1710 = vweird.f32 %v1704
    %vm1711 = vmor %vm1709, %vm1710
    %v1712 = vsel %vm1711, %v1704, %v1708
    %v1713 = vand.u32 2147483647, %v1703
    %vm1714 = vcmp.eq.f32.partialorder %v1713, 8.507059e+37
    %v1715 = vand.u32 %v1703, 2147483648
    %v1716 = vor.u32 1.1754944e-38, %v1715
    %v1717 = vsel %vm1714, %v1716, %v1712
    %v1718 = vmul.f32 1.0, %v1717
    %v1719 = vtanh.pop %v1606
    %v1720 = vmul.f32 %v1718, %v1719
    %v1721 = vlaneseq
    %vm1722 = vcmp.ge.s32.totalorder %v1721, 0
    %vm1723 = vcmp.lt.s32.totalorder %v1721, 256
    %vm1724 = vmand %vm1722, %vm1723
    %1725 = vst.msk [vmem:[#allocation2] sm:$0x3] %vm1724, %v1720
    %1726 = vst.msk [vmem:[#allocation2 + $0x2] sm:$0x3] %vm1724, %v1606
    %1727 = vst.msk [vmem:[%s6] sm:$0x3] %vm1724, %v1720
    %1728 = vst.msk [vmem:[%s6 + $0x2] sm:$0x3] %vm1724, %v1606
    // Predicated region
    $region54: #{lstm_cell_flow_gate_pallas.1} parent=1 // pred_check
      _
    $region55: #{lstm_cell_flow_gate_pallas.1} parent=1 // pred_check_branch
      %1730 = sbr.rel (0) target = $region57
    $region56: #{lstm_cell_flow_gate_pallas.1} parent=1 // pred_region
      _
    $region57: #{lstm_cell_flow_gate_pallas.1} parent=1 // pred_fallthru
      _
    // Predicated region
    $region58: #{lstm_cell_flow_gate_pallas.1} parent=1 // pred_check
      _
    $region59: #{lstm_cell_flow_gate_pallas.1} parent=1 // pred_check_branch
      %1732 = sbr.rel (0) target = $region61
    $region60: #{lstm_cell_flow_gate_pallas.1} parent=1 // pred_region
      _
    $region61: #{lstm_cell_flow_gate_pallas.1} parent=1 // pred_fallthru
      _
    %1733 = vsyncpa [#allocation5], 1
    %1734 = vsyncpa [#allocation7], 1
    %1735 = vsyncpa [#allocation10], 1
    %1736 = vsyncpa [#allocation13], 1

</llo_original>
